<compile_context>
chip_gen: v7x
topology: tpu7x:2x2x1
jax: 0.10.0
libtpu: 0.0.40
codegen_flags: <defaults>
</compile_context>

<pallas_src>
import functools

import jax
import jax.numpy as jnp
import numpy as np
from jax.experimental import pallas as pl
from jax.experimental.pallas import tpu as pltpu

LAMBDA_CLASS = 1.0
LAMBDA_NOOBJ = 10.0
LAMBDA_OBJ = 1.0
LAMBDA_BOX = 10.0

LANE = 128
SUB_ROWS = 32          # pad N only up to a multiple of 32*128 (covers bf16/int8 tiling)
TCH = 10               # target channels: obj, x, y, w, h, class, aw, ah, 1/aw, 1/ah


def _device_defaults():
    """(n_cores, tile_rows, vmem_limit_cap) chosen per TPU generation."""
    kind = ""
    try:
        kind = jax.devices()[0].device_kind.lower()
    except Exception:
        pass
    if "v7" in kind:                       # 2 TensorCores, 64 MiB VMEM per core
        return 2, 256, 56 * 1024 * 1024
    if "v6" in kind:                       # 1 TC, 128 MiB VMEM -> large tiles pay off
        return 1, 512, 100 * 1024 * 1024
    if "v2" in kind or "v3" in kind:       # small VMEM parts
        return 1, 128, 12 * 1024 * 1024
    if "v4" in kind or "v5" in kind:       # 128 MiB VMEM
        return 1, 256, 96 * 1024 * 1024
    return 1, 256, 56 * 1024 * 1024


def _row_block_sum(v):
    """(TM, 128) -> (8, 128): fold groups of 8 rows with aligned vreg adds (no XLU)."""
    tm = v.shape[0]
    red = v[0:8, :]
    for r in range(1, tm // 8):
        red = red + v[r * 8:(r + 1) * 8, :]
    return red


def _yolo_loss_kernel(p_ref, t_ref, out_ref, acc_ref, *, n_valid):
    # p_ref: (CH, TM, 128) prediction tile   rows: 0 obj logit, 1:3 xy, 3:5 wh, 5: cls
    # t_ref: (10, TM, 128) target tile       rows: obj, x, y, w, h, class, aw, ah, 1/aw, 1/ah
    # out_ref: (1, 8, 128) per-core partial sums (lanes 0..5)
    # acc_ref: (6, 8, 128) VMEM accumulator scratch
    CH, TM, _ = p_ref.shape
    num_classes = CH - 5
    c = pl.program_id(0)
    i = pl.program_id(1)

    @pl.when(i == 0)
    def _init():
        acc_ref[...] = jnp.zeros_like(acc_ref)

    f32 = jnp.float32
    x0 = p_ref[0].astype(f32)            # objectness logits
    pxr = p_ref[1].astype(f32)
    pyr = p_ref[2].astype(f32)
    pwr = p_ref[3].astype(f32)
    phr = p_ref[4].astype(f32)

    t_obj = t_ref[0].astype(f32)
    tx = t_ref[1].astype(f32)
    ty = t_ref[2].astype(f32)
    tw = t_ref[3].astype(f32)
    th = t_ref[4].astype(f32)
    label = t_ref[5].astype(f32)
    aw = t_ref[6].astype(f32)
    ah = t_ref[7].astype(f32)
    inv_aw = t_ref[8].astype(f32)
    inv_ah = t_ref[9].astype(f32)

    # ---- element validity (ragged tail / partial last block), from program ids only
    base = (c * pl.num_programs(1) + i) * (TM * LANE)
    flat = base + (jax.lax.broadcasted_iota(jnp.int32, (TM, LANE), 0) * LANE
                   + jax.lax.broadcasted_iota(jnp.int32, (TM, LANE), 1))
    valid = flat < n_valid

    obj_m = jnp.logical_and(valid, t_obj == 1.0)
    noobj_m = jnp.logical_and(valid, t_obj == 0.0)

    # BCEWithLogits(x, y) = softplus(x) - x*y ; numerically stable softplus:
    sp_x0 = jnp.maximum(x0, 0.0) + jnp.log1p(jnp.exp(-jnp.abs(x0)))

    # ---- decode preds & IoU (midpoint) vs ORIGINAL targets --------------------------
    px = jax.nn.sigmoid(pxr)
    py = jax.nn.sigmoid(pyr)
    pw = jnp.exp(pwr * aw)               # literal exp(pred * anchor) as in PyTorch code
    ph = jnp.exp(phr * ah)

    b1x1, b1x2 = px - pw * 0.5, px + pw * 0.5
    b1y1, b1y2 = py - ph * 0.5, py + ph * 0.5
    b2x1, b2x2 = tx - tw * 0.5, tx + tw * 0.5
    b2y1, b2y2 = ty - th * 0.5, ty + th * 0.5
    inter = (jnp.maximum(jnp.minimum(b1x2, b2x2) - jnp.maximum(b1x1, b2x1), 0.0)
             * jnp.maximum(jnp.minimum(b1y2, b2y2) - jnp.maximum(b1y1, b2y1), 0.0))
    area1 = jnp.abs((b1x2 - b1x1) * (b1y2 - b1y1))
    area2 = jnp.abs((b2x2 - b2x1) * (b2y2 - b2y1))
    iou = inter * pl.reciprocal(area1 + area2 - inter + 1e-6, approx=True)

    # ---- per-element loss terms (where-select so masked-out NaN/Inf cannot leak) ----
    noobj_term = jnp.where(noobj_m, sp_x0, 0.0)               # t_obj == 0 there
    obj_term = jnp.where(obj_m, sp_x0 - x0 * iou, 0.0)        # t_obj == 1 there

    tw_log = jnp.log(tw * inv_aw + 1e-16)
    th_log = jnp.log(th * inv_ah + 1e-16)
    box_se = ((px - tx) ** 2 + (py - ty) ** 2
              + (pwr - tw_log) ** 2 + (phr - th_log) ** 2)
    box_term = jnp.where(obj_m, box_se, 0.0)

    # class cross-entropy: classes stay on the leading (non-vreg) axis -> short loop of
    # full-vreg VPU/EUP ops, no cross-lane reductions.
    mx = p_ref[5].astype(f32)
    for cc in range(1, num_classes):
        mx = jnp.maximum(mx, p_ref[5 + cc].astype(f32))
    esum = jnp.zeros((TM, LANE), f32)
    sel = jnp.zeros((TM, LANE), f32)
    for cc in range(num_classes):
        lg = p_ref[5 + cc].astype(f32)
        esum = esum + jnp.exp(lg - mx)
        sel = jnp.where(label == float(cc), lg, sel)
    ce = mx + jnp.log(esum) - sel
    ce_term = jnp.where(obj_m, ce, 0.0)

    obj_cnt = jnp.where(obj_m, 1.0, 0.0)
    noobj_cnt = jnp.where(noobj_m, 1.0, 0.0)

    # ---- accumulate into a small (6, 8, 128) scratch (8x-32x less store traffic) ----
    for q, term in enumerate((obj_term, noobj_term, box_term, ce_term,
                              obj_cnt, noobj_cnt)):
        acc_ref[q] = acc_ref[q] + _row_block_sum(term)

    # ---- finalize this core's partials: 6 scalar reductions, lane-dense store -------
    @pl.when(i == pl.num_programs(1) - 1)
    def _finalize():
        lane = jax.lax.broadcasted_iota(jnp.int32, (1, 8, LANE), 2)
        blk = jnp.zeros((1, 8, LANE), jnp.float32)
        for q in range(6):
            blk = blk + jnp.where(lane == q, jnp.sum(acc_ref[q]), 0.0)
        out_ref[...] = blk


def yolo_loss(prediction, target, anchors, *, tile_rows=None, n_cores=None,
              pred_dtype=None):
    """prediction: (B, A, S, S, 5+C); target: (B, A, S, S, 6); anchors: (A, 2)."""
    B, A, S1, S2, CH = prediction.shape
    N = B * A * S1 * S2

    dflt_cores, dflt_tile, vmem_cap = _device_defaults()
    if n_cores is None:
        n_cores = dflt_cores
    if tile_rows is None:
        tile_rows = dflt_tile

    # rows padded only up to a multiple of 32 (<= 4095 extra elements); the ragged
    # tail is masked in-kernel, so no pad to a full tile multiple is needed.
    M = pl.cdiv(N, SUB_ROWS * LANE) * SUB_ROWS
    n_cols = M * LANE
    pad = n_cols - N

    tile_rows = min(int(tile_rows), M)
    tile_rows = max(SUB_ROWS, (tile_rows // SUB_ROWS) * SUB_ROWS)
    total_tiles = pl.cdiv(M, tile_rows)
    tiles_per_core = pl.cdiv(total_tiles, n_cores)

    # ---- relayout to channel-major (CH, M, 128) -------------------------------------
    # TODO(synk): emit channel-major activations from the producing network so this
    # transpose does not cost an extra HBM round trip at real sizes.
    p2 = prediction.reshape(N, CH)
    if pred_dtype is not None:
        p2 = p2.astype(pred_dtype)

    # targets + per-element anchor channels (aw, ah, 1/aw, 1/ah): removes the in-kernel
    # anchor reconstruction and the two per-element divides.
    anc = anchors.astype(jnp.float32)                                  # (A, 2)
    anc_feat = jnp.concatenate([anc, 1.0 / anc], axis=-1)              # (A, 4)
    anc_map = jnp.broadcast_to(anc_feat.reshape(1, A, 1, 1, 4),
                               (B, A, S1, S2, 4)).reshape(N, 4)
    t2 = jnp.concatenate([target.reshape(N, 6).astype(jnp.float32), anc_map], axis=-1)

    if pad:
        p2 = jnp.pad(p2, ((0, pad), (0, 0)))
        t2 = jnp.pad(t2, ((0, pad), (0, 0)))
    p3 = p2.T.reshape(CH, M, LANE)
    t3 = t2.T.reshape(TCH, M, LANE)

    # ---- pallas call ------------------------------------------------------------------
    block_bytes = (CH * p3.dtype.itemsize + TCH * t3.dtype.itemsize) * tile_rows * LANE
    vmem_limit = int(min(vmem_cap, max(2 * block_bytes + (24 << 20), 32 << 20)))

    def block_map(c, i):
        # clamp over-range tiles (possible when total_tiles % n_cores != 0); their
        # contribution is zeroed in-kernel via the flat-index validity mask.
        return (0, jnp.minimum(c * tiles_per_core + i, total_tiles - 1), 0)

    kernel = functools.partial(_yolo_loss_kernel, n_valid=N)

    partials = pl.pallas_call(
        kernel,
        out_shape=jax.ShapeDtypeStruct((n_cores, 8, LANE), jnp.float32),
        grid=(n_cores, tiles_per_core),
        in_specs=[
            pl.BlockSpec((CH, tile_rows, LANE), block_map),
            pl.BlockSpec((TCH, tile_rows, LANE), block_map),
        ],
        out_specs=pl.BlockSpec((1, 8, LANE), lambda c, i: (c, 0, 0)),
        scratch_shapes=[pltpu.VMEM((6, 8, LANE), jnp.float32)],
        compiler_params=pltpu.CompilerParams(
            dimension_semantics=("parallel", "arbitrary"),
            vmem_limit_bytes=vmem_limit),
    )(p3, t3)

    # combine per-core partial sums (tiny epilogue); divide only here (globally), so a
    # tile with no objects never divides by zero.  obj_cnt == 0 overall gives Inf/NaN,
    # matching the PyTorch reference with an empty mask.
    sums = jnp.sum(partials[:, 0, :], axis=0)
    obj_sum, noobj_sum, box_sum, cls_sum = sums[0], sums[1], sums[2], sums[3]
    obj_cnt, noobj_cnt = sums[4], sums[5]
    return (LAMBDA_BOX * box_sum / (obj_cnt * 4.0)
            + LAMBDA_OBJ * obj_sum / obj_cnt
            + LAMBDA_NOOBJ * noobj_sum / noobj_cnt
            + LAMBDA_CLASS * cls_sum / obj_cnt)


def yolo_loss_ref(prediction, target, anchors):
    """Pure-JAX reference mirroring the PyTorch forward (masked means)."""
    pred = prediction.astype(jnp.float32)
    tgt = target.astype(jnp.float32)
    anc = anchors.reshape(1, anchors.shape[0], 1, 1, 2).astype(jnp.float32)

    obj = tgt[..., 0] == 1.0
    noobj = tgt[..., 0] == 0.0

    def bce(x, y):
        return jnp.maximum(x, 0.0) + jnp.log1p(jnp.exp(-jnp.abs(x))) - x * y

    def masked_mean(v, m):
        m = m.astype(jnp.float32)
        return jnp.sum(v * m) / jnp.sum(m)

    no_object_loss = masked_mean(bce(pred[..., 0], tgt[..., 0]), noobj)

    pxy = jax.nn.sigmoid(pred[..., 1:3])
    pwh = jnp.exp(pred[..., 3:5] * anc)
    b1x1, b1x2 = pxy[..., 0] - pwh[..., 0] / 2, pxy[..., 0] + pwh[..., 0] / 2
    b1y1, b1y2 = pxy[..., 1] - pwh[..., 1] / 2, pxy[..., 1] + pwh[..., 1] / 2
    b2x1, b2x2 = tgt[..., 1] - tgt[..., 3] / 2, tgt[..., 1] + tgt[..., 3] / 2
    b2y1, b2y2 = tgt[..., 2] - tgt[..., 4] / 2, tgt[..., 2] + tgt[..., 4] / 2
    inter = (jnp.maximum(jnp.minimum(b1x2, b2x2) - jnp.maximum(b1x1, b2x1), 0.0)
             * jnp.maximum(jnp.minimum(b1y2, b2y2) - jnp.maximum(b1y1, b2y1), 0.0))
    a1 = jnp.abs((b1x2 - b1x1) * (b1y2 - b1y1))
    a2 = jnp.abs((b2x2 - b2x1) * (b2y2 - b2y1))
    iou = inter / (a1 + a2 - inter + 1e-6)

    object_loss = masked_mean(bce(pred[..., 0], iou * tgt[..., 0]), obj)

    twh_log = jnp.log(1e-16 + tgt[..., 3:5] / anc)
    box_se = (jnp.sum((pxy - tgt[..., 1:3]) ** 2, axis=-1)
              + jnp.sum((pred[..., 3:5] - twh_log) ** 2, axis=-1))
    obj_f = obj.astype(jnp.float32)
    box_loss = jnp.sum(box_se * obj_f) / (jnp.sum(obj_f) * 4.0)

    logits = pred[..., 5:]
    lse = jax.nn.logsumexp(logits, axis=-1)
    lbl = tgt[..., 5].astype(jnp.int32)
    sel = jnp.take_along_axis(logits, lbl[..., None], axis=-1)[..., 0]
    class_loss = masked_mean(lse - sel, obj)

    return (LAMBDA_BOX * box_loss + LAMBDA_OBJ * object_loss
            + LAMBDA_NOOBJ * no_object_loss + LAMBDA_CLASS * class_loss)


if __name__ == "__main__":
    B, A, S, C = 2, 3, 8, 4           # small shapes; CH = 5 + C = 9, N = 384
    CH = 5 + C
    key = jax.random.PRNGKey(0)
    k1, k2, k3, k4, k5 = jax.random.split(key, 5)

    prediction = jax.random.normal(k1, (B, A, S, S, CH), dtype=jnp.float32)

    # target: [obj, x, y, w, h, class]
    obj_flag = (jax.random.uniform(k2, (B, A, S, S)) < 0.15).astype(jnp.float32)
    obj_flag = obj_flag.at[0, 0, 0, 0].set(1.0)      # guarantee at least one object
    xy = jax.random.uniform(k3, (B, A, S, S, 2), minval=0.05, maxval=0.95)
    wh = jax.random.uniform(k4, (B, A, S, S, 2), minval=0.5, maxval=3.0)
    cls = jax.random.randint(k5, (B, A, S, S, 1), 0, C).astype(jnp.float32)
    target = jnp.concatenate([obj_flag[..., None], xy, wh, cls], axis=-1)

    anchors = jnp.array([[1.0, 1.0], [2.0, 1.5], [0.5, 0.8]], dtype=jnp.float32)

    loss = jax.block_until_ready(jax.jit(yolo_loss)(prediction, target, anchors))
    ref = jax.block_until_ready(yolo_loss_ref(prediction, target, anchors))
    np.testing.assert_allclose(np.array(loss), np.array(ref), rtol=1e-3, atol=1e-3)

    print("KERNEL_OK")
</pallas_src>

<mosaic_0001>
module attributes {stable_mosaic.version = 11 : i64} {
  func.func @_yolo_loss_kernel(%arg0: i32, %arg1: i32, %arg2: memref<9x32x128xf32, #tpu.memory_space<vmem>>, %arg3: memref<10x32x128xf32, #tpu.memory_space<vmem>>, %arg4: memref<1x8x128xf32, #tpu.memory_space<vmem>>, %arg5: memref<6x8x128xf32, #tpu.memory_space<vmem>>) attributes {dimension_semantics = [#tpu.dimension_semantics<parallel>, #tpu.dimension_semantics<arbitrary>], iteration_bounds = array<i64: 1, 1>, scalar_prefetch = 0 : i64, scratch_operands = 1 : i64, tpu.core_type = #tpu.core_type<tc>, window_params = [{transform_indices = @transform_0, window_bounds = array<i64: 9, 32, 128>}, {transform_indices = @transform_1, window_bounds = array<i64: 10, 32, 128>}, {transform_indices = @transform_2, window_bounds = array<i64: 1, 8, 128>}]} {
    %c0_i32 = arith.constant 0 : i32
    %0 = arith.cmpi eq, %arg1, %c0_i32 : i32
    %1 = arith.extui %0 : i1 to i32
    %c0_i32_0 = arith.constant 0 : i32
    %2 = arith.cmpi ne, %1, %c0_i32_0 : i32
    scf.if %2 {
      %cst_130 = arith.constant 0.000000e+00 : f32
      %286 = vector.broadcast %cst_130 : f32 to vector<6x8x128xf32>
      %c0_131 = arith.constant 0 : index
      %c0_132 = arith.constant 0 : index
      %c0_133 = arith.constant 0 : index
      %287 = vector.load %arg5[%c0_131, %c0_132, %c0_133] : memref<6x8x128xf32, #tpu.memory_space<vmem>>, vector<6x8x128xf32>
      tpu.vector_store %arg5[%c0_131, %c0_132, %c0_133], %286 {strides = array<i32>} : memref<6x8x128xf32, #tpu.memory_space<vmem>>, vector<6x8x128xf32>,
    } else {
    }
    %c0 = arith.constant 0 : index
    %c0_1 = arith.constant 0 : index
    %c0_2 = arith.constant 0 : index
    %3 = vector.load %arg2[%c0, %c0_1, %c0_2] : memref<9x32x128xf32, #tpu.memory_space<vmem>>, vector<1x32x128xf32>
    %4 = vector.shape_cast %3 : vector<1x32x128xf32> to vector<32x128xf32>
    %c1 = arith.constant 1 : index
    %c0_3 = arith.constant 0 : index
    %c0_4 = arith.constant 0 : index
    %5 = vector.load %arg2[%c1, %c0_3, %c0_4] : memref<9x32x128xf32, #tpu.memory_space<vmem>>, vector<1x32x128xf32>
    %6 = vector.shape_cast %5 : vector<1x32x128xf32> to vector<32x128xf32>
    %c2 = arith.constant 2 : index
    %c0_5 = arith.constant 0 : index
    %c0_6 = arith.constant 0 : index
    %7 = vector.load %arg2[%c2, %c0_5, %c0_6] : memref<9x32x128xf32, #tpu.memory_space<vmem>>, vector<1x32x128xf32>
    %8 = vector.shape_cast %7 : vector<1x32x128xf32> to vector<32x128xf32>
    %c3 = arith.constant 3 : index
    %c0_7 = arith.constant 0 : index
    %c0_8 = arith.constant 0 : index
    %9 = vector.load %arg2[%c3, %c0_7, %c0_8] : memref<9x32x128xf32, #tpu.memory_space<vmem>>, vector<1x32x128xf32>
    %10 = vector.shape_cast %9 : vector<1x32x128xf32> to vector<32x128xf32>
    %c4 = arith.constant 4 : index
    %c0_9 = arith.constant 0 : index
    %c0_10 = arith.constant 0 : index
    %11 = vector.load %arg2[%c4, %c0_9, %c0_10] : memref<9x32x128xf32, #tpu.memory_space<vmem>>, vector<1x32x128xf32>
    %12 = vector.shape_cast %11 : vector<1x32x128xf32> to vector<32x128xf32>
    %c0_11 = arith.constant 0 : index
    %c0_12 = arith.constant 0 : index
    %c0_13 = arith.constant 0 : index
    %13 = vector.load %arg3[%c0_11, %c0_12, %c0_13] : memref<10x32x128xf32, #tpu.memory_space<vmem>>, vector<1x32x128xf32>
    %14 = vector.shape_cast %13 : vector<1x32x128xf32> to vector<32x128xf32>
    %c1_14 = arith.constant 1 : index
    %c0_15 = arith.constant 0 : index
    %c0_16 = arith.constant 0 : index
    %15 = vector.load %arg3[%c1_14, %c0_15, %c0_16] : memref<10x32x128xf32, #tpu.memory_space<vmem>>, vector<1x32x128xf32>
    %16 = vector.shape_cast %15 : vector<1x32x128xf32> to vector<32x128xf32>
    %c2_17 = arith.constant 2 : index
    %c0_18 = arith.constant 0 : index
    %c0_19 = arith.constant 0 : index
    %17 = vector.load %arg3[%c2_17, %c0_18, %c0_19] : memref<10x32x128xf32, #tpu.memory_space<vmem>>, vector<1x32x128xf32>
    %18 = vector.shape_cast %17 : vector<1x32x128xf32> to vector<32x128xf32>
    %c3_20 = arith.constant 3 : index
    %c0_21 = arith.constant 0 : index
    %c0_22 = arith.constant 0 : index
    %19 = vector.load %arg3[%c3_20, %c0_21, %c0_22] : memref<10x32x128xf32, #tpu.memory_space<vmem>>, vector<1x32x128xf32>
    %20 = vector.shape_cast %19 : vector<1x32x128xf32> to vector<32x128xf32>
    %c4_23 = arith.constant 4 : index
    %c0_24 = arith.constant 0 : index
    %c0_25 = arith.constant 0 : index
    %21 = vector.load %arg3[%c4_23, %c0_24, %c0_25] : memref<10x32x128xf32, #tpu.memory_space<vmem>>, vector<1x32x128xf32>
    %22 = vector.shape_cast %21 : vector<1x32x128xf32> to vector<32x128xf32>
    %c5 = arith.constant 5 : index
    %c0_26 = arith.constant 0 : index
    %c0_27 = arith.constant 0 : index
    %23 = vector.load %arg3[%c5, %c0_26, %c0_27] : memref<10x32x128xf32, #tpu.memory_space<vmem>>, vector<1x32x128xf32>
    %24 = vector.shape_cast %23 : vector<1x32x128xf32> to vector<32x128xf32>
    %c6 = arith.constant 6 : index
    %c0_28 = arith.constant 0 : index
    %c0_29 = arith.constant 0 : index
    %25 = vector.load %arg3[%c6, %c0_28, %c0_29] : memref<10x32x128xf32, #tpu.memory_space<vmem>>, vector<1x32x128xf32>
    %26 = vector.shape_cast %25 : vector<1x32x128xf32> to vector<32x128xf32>
    %c7 = arith.constant 7 : index
    %c0_30 = arith.constant 0 : index
    %c0_31 = arith.constant 0 : index
    %27 = vector.load %arg3[%c7, %c0_30, %c0_31] : memref<10x32x128xf32, #tpu.memory_space<vmem>>, vector<1x32x128xf32>
    %28 = vector.shape_cast %27 : vector<1x32x128xf32> to vector<32x128xf32>
    %c8 = arith.constant 8 : index
    %c0_32 = arith.constant 0 : index
    %c0_33 = arith.constant 0 : index
    %29 = vector.load %arg3[%c8, %c0_32, %c0_33] : memref<10x32x128xf32, #tpu.memory_space<vmem>>, vector<1x32x128xf32>
    %30 = vector.shape_cast %29 : vector<1x32x128xf32> to vector<32x128xf32>
    %c9 = arith.constant 9 : index
    %c0_34 = arith.constant 0 : index
    %c0_35 = arith.constant 0 : index
    %31 = vector.load %arg3[%c9, %c0_34, %c0_35] : memref<10x32x128xf32, #tpu.memory_space<vmem>>, vector<1x32x128xf32>
    %32 = vector.shape_cast %31 : vector<1x32x128xf32> to vector<32x128xf32>
    %c1_i32 = arith.constant 1 : i32
    %33 = arith.muli %arg0, %c1_i32 : i32
    %34 = arith.addi %33, %arg1 : i32
    %c4096_i32 = arith.constant 4096 : i32
    %35 = arith.muli %34, %c4096_i32 : i32
    %36 = tpu.iota {dimensions = array<i32: 0>} : vector<32x128xi32>
    %c128_i32 = arith.constant 128 : i32
    %37 = vector.broadcast %c128_i32 : i32 to vector<32x128xi32>
    %38 = arith.muli %36, %37 : vector<32x128xi32>
    %39 = tpu.iota {dimensions = array<i32: 1>} : vector<32x128xi32>
    %40 = arith.addi %38, %39 : vector<32x128xi32>
    %41 = vector.broadcast %35 : i32 to vector<32x128xi32>
    %42 = arith.addi %41, %40 : vector<32x128xi32>
    %c384_i32 = arith.constant 384 : i32
    %43 = vector.broadcast %c384_i32 : i32 to vector<32x128xi32>
    %44 = arith.cmpi slt, %42, %43 : vector<32x128xi32>
    %cst = arith.constant 1.000000e+00 : f32
    %45 = vector.broadcast %cst : f32 to vector<32x128xf32>
    %46 = arith.cmpf oeq, %14, %45 : vector<32x128xf32>
    %47 = arith.andi %44, %46 : vector<32x128xi1>
    %cst_36 = arith.constant 0.000000e+00 : f32
    %48 = vector.broadcast %cst_36 : f32 to vector<32x128xf32>
    %49 = arith.cmpf oeq, %14, %48 : vector<32x128xf32>
    %50 = arith.andi %44, %49 : vector<32x128xi1>
    %cst_37 = arith.constant 0.000000e+00 : f32
    %51 = vector.broadcast %cst_37 : f32 to vector<32x128xf32>
    %52 = arith.maximumf %4, %51 : vector<32x128xf32>
    %53 = math.absf %4 : vector<32x128xf32>
    %cst_38 = arith.constant 0.000000e+00 : f32
    %54 = vector.broadcast %cst_38 : f32 to vector<32x128xf32>
    %55 = arith.subf %54, %53 : vector<32x128xf32>
    %56 = math.exp %55 : vector<32x128xf32>
    %57 = math.log1p %56 : vector<32x128xf32>
    %58 = arith.addf %52, %57 : vector<32x128xf32>
    %59 = arith.negf %6 : vector<32x128xf32>
    %60 = math.exp %59 : vector<32x128xf32>
    %cst_39 = arith.constant 1.000000e+00 : f32
    %61 = vector.broadcast %cst_39 : f32 to vector<32x128xf32>
    %62 = arith.addf %61, %60 : vector<32x128xf32>
    %63 = arith.divf %61, %62 : vector<32x128xf32>
    %64 = arith.negf %8 : vector<32x128xf32>
    %65 = math.exp %64 : vector<32x128xf32>
    %cst_40 = arith.constant 1.000000e+00 : f32
    %66 = vector.broadcast %cst_40 : f32 to vector<32x128xf32>
    %67 = arith.addf %66, %65 : vector<32x128xf32>
    %68 = arith.divf %66, %67 : vector<32x128xf32>
    %69 = arith.mulf %10, %26 : vector<32x128xf32>
    %70 = math.exp %69 : vector<32x128xf32>
    %71 = arith.mulf %12, %28 : vector<32x128xf32>
    %72 = math.exp %71 : vector<32x128xf32>
    %cst_41 = arith.constant 5.000000e-01 : f32
    %73 = vector.broadcast %cst_41 : f32 to vector<32x128xf32>
    %74 = arith.mulf %70, %73 : vector<32x128xf32>
    %75 = arith.subf %63, %74 : vector<32x128xf32>
    %cst_42 = arith.constant 5.000000e-01 : f32
    %76 = vector.broadcast %cst_42 : f32 to vector<32x128xf32>
    %77 = arith.mulf %70, %76 : vector<32x128xf32>
    %78 = arith.addf %63, %77 : vector<32x128xf32>
    %cst_43 = arith.constant 5.000000e-01 : f32
    %79 = vector.broadcast %cst_43 : f32 to vector<32x128xf32>
    %80 = arith.mulf %72, %79 : vector<32x128xf32>
    %81 = arith.subf %68, %80 : vector<32x128xf32>
    %cst_44 = arith.constant 5.000000e-01 : f32
    %82 = vector.broadcast %cst_44 : f32 to vector<32x128xf32>
    %83 = arith.mulf %72, %82 : vector<32x128xf32>
    %84 = arith.addf %68, %83 : vector<32x128xf32>
    %cst_45 = arith.constant 5.000000e-01 : f32
    %85 = vector.broadcast %cst_45 : f32 to vector<32x128xf32>
    %86 = arith.mulf %20, %85 : vector<32x128xf32>
    %87 = arith.subf %16, %86 : vector<32x128xf32>
    %cst_46 = arith.constant 5.000000e-01 : f32
    %88 = vector.broadcast %cst_46 : f32 to vector<32x128xf32>
    %89 = arith.mulf %20, %88 : vector<32x128xf32>
    %90 = arith.addf %16, %89 : vector<32x128xf32>
    %cst_47 = arith.constant 5.000000e-01 : f32
    %91 = vector.broadcast %cst_47 : f32 to vector<32x128xf32>
    %92 = arith.mulf %22, %91 : vector<32x128xf32>
    %93 = arith.subf %18, %92 : vector<32x128xf32>
    %cst_48 = arith.constant 5.000000e-01 : f32
    %94 = vector.broadcast %cst_48 : f32 to vector<32x128xf32>
    %95 = arith.mulf %22, %94 : vector<32x128xf32>
    %96 = arith.addf %18, %95 : vector<32x128xf32>
    %97 = arith.minimumf %78, %90 : vector<32x128xf32>
    %98 = arith.maximumf %75, %87 : vector<32x128xf32>
    %99 = arith.subf %97, %98 : vector<32x128xf32>
    %cst_49 = arith.constant 0.000000e+00 : f32
    %100 = vector.broadcast %cst_49 : f32 to vector<32x128xf32>
    %101 = arith.maximumf %99, %100 : vector<32x128xf32>
    %102 = arith.minimumf %84, %96 : vector<32x128xf32>
    %103 = arith.maximumf %81, %93 : vector<32x128xf32>
    %104 = arith.subf %102, %103 : vector<32x128xf32>
    %cst_50 = arith.constant 0.000000e+00 : f32
    %105 = vector.broadcast %cst_50 : f32 to vector<32x128xf32>
    %106 = arith.maximumf %104, %105 : vector<32x128xf32>
    %107 = arith.mulf %101, %106 : vector<32x128xf32>
    %108 = arith.subf %78, %75 : vector<32x128xf32>
    %109 = arith.subf %84, %81 : vector<32x128xf32>
    %110 = arith.mulf %108, %109 : vector<32x128xf32>
    %111 = math.absf %110 : vector<32x128xf32>
    %112 = arith.subf %90, %87 : vector<32x128xf32>
    %113 = arith.subf %96, %93 : vector<32x128xf32>
    %114 = arith.mulf %112, %113 : vector<32x128xf32>
    %115 = math.absf %114 : vector<32x128xf32>
    %116 = arith.addf %111, %115 : vector<32x128xf32>
    %117 = arith.subf %116, %107 : vector<32x128xf32>
    %cst_51 = arith.constant 9.99999997E-7 : f32
    %118 = vector.broadcast %cst_51 : f32 to vector<32x128xf32>
    %119 = arith.addf %117, %118 : vector<32x128xf32>
    %120 = tpu.reciprocal %119 {approx = true} : vector<32x128xf32> -> vector<32x128xf32>
    %121 = arith.mulf %107, %120 : vector<32x128xf32>
    %cst_52 = arith.constant 0.000000e+00 : f32
    %122 = vector.broadcast %cst_52 : f32 to vector<32x128xf32>
    %123 = arith.select %50, %58, %122 : vector<32x128xi1>, vector<32x128xf32>
    %124 = arith.mulf %4, %121 : vector<32x128xf32>
    %125 = arith.subf %58, %124 : vector<32x128xf32>
    %cst_53 = arith.constant 0.000000e+00 : f32
    %126 = vector.broadcast %cst_53 : f32 to vector<32x128xf32>
    %127 = arith.select %47, %125, %126 : vector<32x128xi1>, vector<32x128xf32>
    %128 = arith.mulf %20, %30 : vector<32x128xf32>
    %cst_54 = arith.constant 1.000000e-16 : f32
    %129 = vector.broadcast %cst_54 : f32 to vector<32x128xf32>
    %130 = arith.addf %128, %129 : vector<32x128xf32>
    %131 = math.log %130 : vector<32x128xf32>
    %132 = arith.mulf %22, %32 : vector<32x128xf32>
    %cst_55 = arith.constant 1.000000e-16 : f32
    %133 = vector.broadcast %cst_55 : f32 to vector<32x128xf32>
    %134 = arith.addf %132, %133 : vector<32x128xf32>
    %135 = math.log %134 : vector<32x128xf32>
    %136 = arith.subf %63, %16 : vector<32x128xf32>
    %137 = arith.mulf %136, %136 : vector<32x128xf32>
    %138 = arith.subf %68, %18 : vector<32x128xf32>
    %139 = arith.mulf %138, %138 : vector<32x128xf32>
    %140 = arith.addf %137, %139 : vector<32x128xf32>
    %141 = arith.subf %10, %131 : vector<32x128xf32>
    %142 = arith.mulf %141, %141 : vector<32x128xf32>
    %143 = arith.addf %140, %142 : vector<32x128xf32>
    %144 = arith.subf %12, %135 : vector<32x128xf32>
    %145 = arith.mulf %144, %144 : vector<32x128xf32>
    %146 = arith.addf %143, %145 : vector<32x128xf32>
    %cst_56 = arith.constant 0.000000e+00 : f32
    %147 = vector.broadcast %cst_56 : f32 to vector<32x128xf32>
    %148 = arith.select %47, %146, %147 : vector<32x128xi1>, vector<32x128xf32>
    %c5_57 = arith.constant 5 : index
    %c0_58 = arith.constant 0 : index
    %c0_59 = arith.constant 0 : index
    %149 = vector.load %arg2[%c5_57, %c0_58, %c0_59] : memref<9x32x128xf32, #tpu.memory_space<vmem>>, vector<1x32x128xf32>
    %150 = vector.shape_cast %149 : vector<1x32x128xf32> to vector<32x128xf32>
    %c6_60 = arith.constant 6 : index
    %c0_61 = arith.constant 0 : index
    %c0_62 = arith.constant 0 : index
    %151 = vector.load %arg2[%c6_60, %c0_61, %c0_62] : memref<9x32x128xf32, #tpu.memory_space<vmem>>, vector<1x32x128xf32>
    %152 = vector.shape_cast %151 : vector<1x32x128xf32> to vector<32x128xf32>
    %153 = arith.maximumf %150, %152 : vector<32x128xf32>
    %c7_63 = arith.constant 7 : index
    %c0_64 = arith.constant 0 : index
    %c0_65 = arith.constant 0 : index
    %154 = vector.load %arg2[%c7_63, %c0_64, %c0_65] : memref<9x32x128xf32, #tpu.memory_space<vmem>>, vector<1x32x128xf32>
    %155 = vector.shape_cast %154 : vector<1x32x128xf32> to vector<32x128xf32>
    %156 = arith.maximumf %153, %155 : vector<32x128xf32>
    %c8_66 = arith.constant 8 : index
    %c0_67 = arith.constant 0 : index
    %c0_68 = arith.constant 0 : index
    %157 = vector.load %arg2[%c8_66, %c0_67, %c0_68] : memref<9x32x128xf32, #tpu.memory_space<vmem>>, vector<1x32x128xf32>
    %158 = vector.shape_cast %157 : vector<1x32x128xf32> to vector<32x128xf32>
    %159 = arith.maximumf %156, %158 : vector<32x128xf32>
    %cst_69 = arith.constant 0.000000e+00 : f32
    %160 = vector.broadcast %cst_69 : f32 to vector<32x128xf32>
    %cst_70 = arith.constant 0.000000e+00 : f32
    %161 = vector.broadcast %cst_70 : f32 to vector<32x128xf32>
    %c5_71 = arith.constant 5 : index
    %c0_72 = arith.constant 0 : index
    %c0_73 = arith.constant 0 : index
    %162 = vector.load %arg2[%c5_71, %c0_72, %c0_73] : memref<9x32x128xf32, #tpu.memory_space<vmem>>, vector<1x32x128xf32>
    %163 = vector.shape_cast %162 : vector<1x32x128xf32> to vector<32x128xf32>
    %164 = arith.subf %163, %159 : vector<32x128xf32>
    %165 = math.exp %164 : vector<32x128xf32>
    %166 = arith.addf %160, %165 : vector<32x128xf32>
    %cst_74 = arith.constant 0.000000e+00 : f32
    %167 = vector.broadcast %cst_74 : f32 to vector<32x128xf32>
    %168 = arith.cmpf oeq, %24, %167 : vector<32x128xf32>
    %169 = arith.select %168, %163, %161 : vector<32x128xi1>, vector<32x128xf32>
    %c6_75 = arith.constant 6 : index
    %c0_76 = arith.constant 0 : index
    %c0_77 = arith.constant 0 : index
    %170 = vector.load %arg2[%c6_75, %c0_76, %c0_77] : memref<9x32x128xf32, #tpu.memory_space<vmem>>, vector<1x32x128xf32>
    %171 = vector.shape_cast %170 : vector<1x32x128xf32> to vector<32x128xf32>
    %172 = arith.subf %171, %159 : vector<32x128xf32>
    %173 = math.exp %172 : vector<32x128xf32>
    %174 = arith.addf %166, %173 : vector<32x128xf32>
    %cst_78 = arith.constant 1.000000e+00 : f32
    %175 = vector.broadcast %cst_78 : f32 to vector<32x128xf32>
    %176 = arith.cmpf oeq, %24, %175 : vector<32x128xf32>
    %177 = arith.select %176, %171, %169 : vector<32x128xi1>, vector<32x128xf32>
    %c7_79 = arith.constant 7 : index
    %c0_80 = arith.constant 0 : index
    %c0_81 = arith.constant 0 : index
    %178 = vector.load %arg2[%c7_79, %c0_80, %c0_81] : memref<9x32x128xf32, #tpu.memory_space<vmem>>, vector<1x32x128xf32>
    %179 = vector.shape_cast %178 : vector<1x32x128xf32> to vector<32x128xf32>
    %180 = arith.subf %179, %159 : vector<32x128xf32>
    %181 = math.exp %180 : vector<32x128xf32>
    %182 = arith.addf %174, %181 : vector<32x128xf32>
    %cst_82 = arith.constant 2.000000e+00 : f32
    %183 = vector.broadcast %cst_82 : f32 to vector<32x128xf32>
    %184 = arith.cmpf oeq, %24, %183 : vector<32x128xf32>
    %185 = arith.select %184, %179, %177 : vector<32x128xi1>, vector<32x128xf32>
    %c8_83 = arith.constant 8 : index
    %c0_84 = arith.constant 0 : index
    %c0_85 = arith.constant 0 : index
    %186 = vector.load %arg2[%c8_83, %c0_84, %c0_85] : memref<9x32x128xf32, #tpu.memory_space<vmem>>, vector<1x32x128xf32>
    %187 = vector.shape_cast %186 : vector<1x32x128xf32> to vector<32x128xf32>
    %188 = arith.subf %187, %159 : vector<32x128xf32>
    %189 = math.exp %188 : vector<32x128xf32>
    %190 = arith.addf %182, %189 : vector<32x128xf32>
    %cst_86 = arith.constant 3.000000e+00 : f32
    %191 = vector.broadcast %cst_86 : f32 to vector<32x128xf32>
    %192 = arith.cmpf oeq, %24, %191 : vector<32x128xf32>
    %193 = arith.select %192, %187, %185 : vector<32x128xi1>, vector<32x128xf32>
    %194 = math.log %190 : vector<32x128xf32>
    %195 = arith.addf %159, %194 : vector<32x128xf32>
    %196 = arith.subf %195, %193 : vector<32x128xf32>
    %cst_87 = arith.constant 0.000000e+00 : f32
    %197 = vector.broadcast %cst_87 : f32 to vector<32x128xf32>
    %198 = arith.select %47, %196, %197 : vector<32x128xi1>, vector<32x128xf32>
    %cst_88 = arith.constant 1.000000e+00 : f32
    %cst_89 = arith.constant 0.000000e+00 : f32
    %199 = vector.broadcast %cst_88 : f32 to vector<32x128xf32>
    %200 = vector.broadcast %cst_89 : f32 to vector<32x128xf32>
    %201 = arith.select %47, %199, %200 : vector<32x128xi1>, vector<32x128xf32>
    %cst_90 = arith.constant 1.000000e+00 : f32
    %cst_91 = arith.constant 0.000000e+00 : f32
    %202 = vector.broadcast %cst_90 : f32 to vector<32x128xf32>
    %203 = vector.broadcast %cst_91 : f32 to vector<32x128xf32>
    %204 = arith.select %50, %202, %203 : vector<32x128xi1>, vector<32x128xf32>
    %c0_92 = arith.constant 0 : index
    %c0_93 = arith.constant 0 : index
    %c0_94 = arith.constant 0 : index
    %205 = vector.load %arg5[%c0_92, %c0_93, %c0_94] : memref<6x8x128xf32, #tpu.memory_space<vmem>>, vector<1x8x128xf32>
    %206 = vector.shape_cast %205 : vector<1x8x128xf32> to vector<8x128xf32>
    %207 = vector.extract_strided_slice %127 {offsets = [0, 0], sizes = [8, 128], strides = [1, 1]} : vector<32x128xf32> to vector<8x128xf32>
    %208 = vector.extract_strided_slice %127 {offsets = [8, 0], sizes = [8, 128], strides = [1, 1]} : vector<32x128xf32> to vector<8x128xf32>
    %209 = arith.addf %207, %208 : vector<8x128xf32>
    %210 = vector.extract_strided_slice %127 {offsets = [16, 0], sizes = [8, 128], strides = [1, 1]} : vector<32x128xf32> to vector<8x128xf32>
    %211 = arith.addf %209, %210 : vector<8x128xf32>
    %212 = vector.extract_strided_slice %127 {offsets = [24, 0], sizes = [8, 128], strides = [1, 1]} : vector<32x128xf32> to vector<8x128xf32>
    %213 = arith.addf %211, %212 : vector<8x128xf32>
    %214 = arith.addf %206, %213 : vector<8x128xf32>
    %c0_95 = arith.constant 0 : index
    %c0_96 = arith.constant 0 : index
    %c0_97 = arith.constant 0 : index
    %215 = vector.load %arg5[%c0_95, %c0_96, %c0_97] : memref<6x8x128xf32, #tpu.memory_space<vmem>>, vector<1x8x128xf32>
    %216 = vector.shape_cast %215 : vector<1x8x128xf32> to vector<8x128xf32>
    %217 = vector.shape_cast %214 : vector<8x128xf32> to vector<1x8x128xf32>
    tpu.vector_store %arg5[%c0_95, %c0_96, %c0_97], %217 {strides = array<i32>} : memref<6x8x128xf32, #tpu.memory_space<vmem>>, vector<1x8x128xf32>,
    %c1_98 = arith.constant 1 : index
    %c0_99 = arith.constant 0 : index
    %c0_100 = arith.constant 0 : index
    %218 = vector.load %arg5[%c1_98, %c0_99, %c0_100] : memref<6x8x128xf32, #tpu.memory_space<vmem>>, vector<1x8x128xf32>
    %219 = vector.shape_cast %218 : vector<1x8x128xf32> to vector<8x128xf32>
    %220 = vector.extract_strided_slice %123 {offsets = [0, 0], sizes = [8, 128], strides = [1, 1]} : vector<32x128xf32> to vector<8x128xf32>
    %221 = vector.extract_strided_slice %123 {offsets = [8, 0], sizes = [8, 128], strides = [1, 1]} : vector<32x128xf32> to vector<8x128xf32>
    %222 = arith.addf %220, %221 : vector<8x128xf32>
    %223 = vector.extract_strided_slice %123 {offsets = [16, 0], sizes = [8, 128], strides = [1, 1]} : vector<32x128xf32> to vector<8x128xf32>
    %224 = arith.addf %222, %223 : vector<8x128xf32>
    %225 = vector.extract_strided_slice %123 {offsets = [24, 0], sizes = [8, 128], strides = [1, 1]} : vector<32x128xf32> to vector<8x128xf32>
    %226 = arith.addf %224, %225 : vector<8x128xf32>
    %227 = arith.addf %219, %226 : vector<8x128xf32>
    %c1_101 = arith.constant 1 : index
    %c0_102 = arith.constant 0 : index
    %c0_103 = arith.constant 0 : index
    %228 = vector.load %arg5[%c1_101, %c0_102, %c0_103] : memref<6x8x128xf32, #tpu.memory_space<vmem>>, vector<1x8x128xf32>
    %229 = vector.shape_cast %228 : vector<1x8x128xf32> to vector<8x128xf32>
    %230 = vector.shape_cast %227 : vector<8x128xf32> to vector<1x8x128xf32>
    tpu.vector_store %arg5[%c1_101, %c0_102, %c0_103], %230 {strides = array<i32>} : memref<6x8x128xf32, #tpu.memory_space<vmem>>, vector<1x8x128xf32>,
    %c2_104 = arith.constant 2 : index
    %c0_105 = arith.constant 0 : index
    %c0_106 = arith.constant 0 : index
    %231 = vector.load %arg5[%c2_104, %c0_105, %c0_106] : memref<6x8x128xf32, #tpu.memory_space<vmem>>, vector<1x8x128xf32>
    %232 = vector.shape_cast %231 : vector<1x8x128xf32> to vector<8x128xf32>
    %233 = vector.extract_strided_slice %148 {offsets = [0, 0], sizes = [8, 128], strides = [1, 1]} : vector<32x128xf32> to vector<8x128xf32>
    %234 = vector.extract_strided_slice %148 {offsets = [8, 0], sizes = [8, 128], strides = [1, 1]} : vector<32x128xf32> to vector<8x128xf32>
    %235 = arith.addf %233, %234 : vector<8x128xf32>
    %236 = vector.extract_strided_slice %148 {offsets = [16, 0], sizes = [8, 128], strides = [1, 1]} : vector<32x128xf32> to vector<8x128xf32>
    %237 = arith.addf %235, %236 : vector<8x128xf32>
    %238 = vector.extract_strided_slice %148 {offsets = [24, 0], sizes = [8, 128], strides = [1, 1]} : vector<32x128xf32> to vector<8x128xf32>
    %239 = arith.addf %237, %238 : vector<8x128xf32>
    %240 = arith.addf %232, %239 : vector<8x128xf32>
    %c2_107 = arith.constant 2 : index
    %c0_108 = arith.constant 0 : index
    %c0_109 = arith.constant 0 : index
    %241 = vector.load %arg5[%c2_107, %c0_108, %c0_109] : memref<6x8x128xf32, #tpu.memory_space<vmem>>, vector<1x8x128xf32>
    %242 = vector.shape_cast %241 : vector<1x8x128xf32> to vector<8x128xf32>
    %243 = vector.shape_cast %240 : vector<8x128xf32> to vector<1x8x128xf32>
    tpu.vector_store %arg5[%c2_107, %c0_108, %c0_109], %243 {strides = array<i32>} : memref<6x8x128xf32, #tpu.memory_space<vmem>>, vector<1x8x128xf32>,
    %c3_110 = arith.constant 3 : index
    %c0_111 = arith.constant 0 : index
    %c0_112 = arith.constant 0 : index
    %244 = vector.load %arg5[%c3_110, %c0_111, %c0_112] : memref<6x8x128xf32, #tpu.memory_space<vmem>>, vector<1x8x128xf32>
    %245 = vector.shape_cast %244 : vector<1x8x128xf32> to vector<8x128xf32>
    %246 = vector.extract_strided_slice %198 {offsets = [0, 0], sizes = [8, 128], strides = [1, 1]} : vector<32x128xf32> to vector<8x128xf32>
    %247 = vector.extract_strided_slice %198 {offsets = [8, 0], sizes = [8, 128], strides = [1, 1]} : vector<32x128xf32> to vector<8x128xf32>
    %248 = arith.addf %246, %247 : vector<8x128xf32>
    %249 = vector.extract_strided_slice %198 {offsets = [16, 0], sizes = [8, 128], strides = [1, 1]} : vector<32x128xf32> to vector<8x128xf32>
    %250 = arith.addf %248, %249 : vector<8x128xf32>
    %251 = vector.extract_strided_slice %198 {offsets = [24, 0], sizes = [8, 128], strides = [1, 1]} : vector<32x128xf32> to vector<8x128xf32>
    %252 = arith.addf %250, %251 : vector<8x128xf32>
    %253 = arith.addf %245, %252 : vector<8x128xf32>
    %c3_113 = arith.constant 3 : index
    %c0_114 = arith.constant 0 : index
    %c0_115 = arith.constant 0 : index
    %254 = vector.load %arg5[%c3_113, %c0_114, %c0_115] : memref<6x8x128xf32, #tpu.memory_space<vmem>>, vector<1x8x128xf32>
    %255 = vector.shape_cast %254 : vector<1x8x128xf32> to vector<8x128xf32>
    %256 = vector.shape_cast %253 : vector<8x128xf32> to vector<1x8x128xf32>
    tpu.vector_store %arg5[%c3_113, %c0_114, %c0_115], %256 {strides = array<i32>} : memref<6x8x128xf32, #tpu.memory_space<vmem>>, vector<1x8x128xf32>,
    %c4_116 = arith.constant 4 : index
    %c0_117 = arith.constant 0 : index
    %c0_118 = arith.constant 0 : index
    %257 = vector.load %arg5[%c4_116, %c0_117, %c0_118] : memref<6x8x128xf32, #tpu.memory_space<vmem>>, vector<1x8x128xf32>
    %258 = vector.shape_cast %257 : vector<1x8x128xf32> to vector<8x128xf32>
    %259 = vector.extract_strided_slice %201 {offsets = [0, 0], sizes = [8, 128], strides = [1, 1]} : vector<32x128xf32> to vector<8x128xf32>
    %260 = vector.extract_strided_slice %201 {offsets = [8, 0], sizes = [8, 128], strides = [1, 1]} : vector<32x128xf32> to vector<8x128xf32>
    %261 = arith.addf %259, %260 : vector<8x128xf32>
    %262 = vector.extract_strided_slice %201 {offsets = [16, 0], sizes = [8, 128], strides = [1, 1]} : vector<32x128xf32> to vector<8x128xf32>
    %263 = arith.addf %261, %262 : vector<8x128xf32>
    %264 = vector.extract_strided_slice %201 {offsets = [24, 0], sizes = [8, 128], strides = [1, 1]} : vector<32x128xf32> to vector<8x128xf32>
    %265 = arith.addf %263, %264 : vector<8x128xf32>
    %266 = arith.addf %258, %265 : vector<8x128xf32>
    %c4_119 = arith.constant 4 : index
    %c0_120 = arith.constant 0 : index
    %c0_121 = arith.constant 0 : index
    %267 = vector.load %arg5[%c4_119, %c0_120, %c0_121] : memref<6x8x128xf32, #tpu.memory_space<vmem>>, vector<1x8x128xf32>
    %268 = vector.shape_cast %267 : vector<1x8x128xf32> to vector<8x128xf32>
    %269 = vector.shape_cast %266 : vector<8x128xf32> to vector<1x8x128xf32>
    tpu.vector_store %arg5[%c4_119, %c0_120, %c0_121], %269 {strides = array<i32>} : memref<6x8x128xf32, #tpu.memory_space<vmem>>, vector<1x8x128xf32>,
    %c5_122 = arith.constant 5 : index
    %c0_123 = arith.constant 0 : index
    %c0_124 = arith.constant 0 : index
    %270 = vector.load %arg5[%c5_122, %c0_123, %c0_124] : memref<6x8x128xf32, #tpu.memory_space<vmem>>, vector<1x8x128xf32>
    %271 = vector.shape_cast %270 : vector<1x8x128xf32> to vector<8x128xf32>
    %272 = vector.extract_strided_slice %204 {offsets = [0, 0], sizes = [8, 128], strides = [1, 1]} : vector<32x128xf32> to vector<8x128xf32>
    %273 = vector.extract_strided_slice %204 {offsets = [8, 0], sizes = [8, 128], strides = [1, 1]} : vector<32x128xf32> to vector<8x128xf32>
    %274 = arith.addf %272, %273 : vector<8x128xf32>
    %275 = vector.extract_strided_slice %204 {offsets = [16, 0], sizes = [8, 128], strides = [1, 1]} : vector<32x128xf32> to vector<8x128xf32>
    %276 = arith.addf %274, %275 : vector<8x128xf32>
    %277 = vector.extract_strided_slice %204 {offsets = [24, 0], sizes = [8, 128], strides = [1, 1]} : vector<32x128xf32> to vector<8x128xf32>
    %278 = arith.addf %276, %277 : vector<8x128xf32>
    %279 = arith.addf %271, %278 : vector<8x128xf32>
    %c5_125 = arith.constant 5 : index
    %c0_126 = arith.constant 0 : index
    %c0_127 = arith.constant 0 : index
    %280 = vector.load %arg5[%c5_125, %c0_126, %c0_127] : memref<6x8x128xf32, #tpu.memory_space<vmem>>, vector<1x8x128xf32>
    %281 = vector.shape_cast %280 : vector<1x8x128xf32> to vector<8x128xf32>
    %282 = vector.shape_cast %279 : vector<8x128xf32> to vector<1x8x128xf32>
    tpu.vector_store %arg5[%c5_125, %c0_126, %c0_127], %282 {strides = array<i32>} : memref<6x8x128xf32, #tpu.memory_space<vmem>>, vector<1x8x128xf32>,
    %c0_i32_128 = arith.constant 0 : i32
    %283 = arith.cmpi eq, %arg1, %c0_i32_128 : i32
    %284 = arith.extui %283 : i1 to i32
    %c0_i32_129 = arith.constant 0 : i32
    %285 = arith.cmpi ne, %284, %c0_i32_129 : i32
    scf.if %285 {
      %286 = tpu.iota {dimensions = array<i32: 2>} : vector<1x8x128xi32>
      %cst_130 = arith.constant 0.000000e+00 : f32
      %287 = vector.broadcast %cst_130 : f32 to vector<1x8x128xf32>
      %c0_i32_131 = arith.constant 0 : i32
      %288 = vector.broadcast %c0_i32_131 : i32 to vector<1x8x128xi32>
      %289 = arith.cmpi eq, %286, %288 : vector<1x8x128xi32>
      %c0_132 = arith.constant 0 : index
      %c0_133 = arith.constant 0 : index
      %c0_134 = arith.constant 0 : index
      %290 = vector.load %arg5[%c0_132, %c0_133, %c0_134] : memref<6x8x128xf32, #tpu.memory_space<vmem>>, vector<1x8x128xf32>
      %291 = vector.shape_cast %290 : vector<1x8x128xf32> to vector<8x128xf32>
      %292 = vector.shape_cast %291 : vector<8x128xf32> to vector<1x8x128xf32>
      %cst_135 = arith.constant dense<0.000000e+00> : vector<1xf32>
      %293 = vector.multi_reduction <add>, %292, %cst_135 [1, 2] : vector<1x8x128xf32> to vector<1xf32>
      %294 = vector.shape_cast %293 : vector<1xf32> to vector<1x1x1xf32>
      %295 = vector.extract %294[0, 0, 0] : f32 from vector<1x1x1xf32>
      %cst_136 = arith.constant 0.000000e+00 : f32
      %296 = vector.broadcast %295 : f32 to vector<1x8x128xf32>
      %297 = vector.broadcast %cst_136 : f32 to vector<1x8x128xf32>
      %298 = arith.select %289, %296, %297 : vector<1x8x128xi1>, vector<1x8x128xf32>
      %299 = arith.addf %287, %298 : vector<1x8x128xf32>
      %c1_i32_137 = arith.constant 1 : i32
      %300 = vector.broadcast %c1_i32_137 : i32 to vector<1x8x128xi32>
      %301 = arith.cmpi eq, %286, %300 : vector<1x8x128xi32>
      %c1_138 = arith.constant 1 : index
      %c0_139 = arith.constant 0 : index
      %c0_140 = arith.constant 0 : index
      %302 = vector.load %arg5[%c1_138, %c0_139, %c0_140] : memref<6x8x128xf32, #tpu.memory_space<vmem>>, vector<1x8x128xf32>
      %303 = vector.shape_cast %302 : vector<1x8x128xf32> to vector<8x128xf32>
      %304 = vector.shape_cast %303 : vector<8x128xf32> to vector<1x8x128xf32>
      %cst_141 = arith.constant dense<0.000000e+00> : vector<1xf32>
      %305 = vector.multi_reduction <add>, %304, %cst_141 [1, 2] : vector<1x8x128xf32> to vector<1xf32>
      %306 = vector.shape_cast %305 : vector<1xf32> to vector<1x1x1xf32>
      %307 = vector.extract %306[0, 0, 0] : f32 from vector<1x1x1xf32>
      %cst_142 = arith.constant 0.000000e+00 : f32
      %308 = vector.broadcast %307 : f32 to vector<1x8x128xf32>
      %309 = vector.broadcast %cst_142 : f32 to vector<1x8x128xf32>
      %310 = arith.select %301, %308, %309 : vector<1x8x128xi1>, vector<1x8x128xf32>
      %311 = arith.addf %299, %310 : vector<1x8x128xf32>
      %c2_i32 = arith.constant 2 : i32
      %312 = vector.broadcast %c2_i32 : i32 to vector<1x8x128xi32>
      %313 = arith.cmpi eq, %286, %312 : vector<1x8x128xi32>
      %c2_143 = arith.constant 2 : index
      %c0_144 = arith.constant 0 : index
      %c0_145 = arith.constant 0 : index
      %314 = vector.load %arg5[%c2_143, %c0_144, %c0_145] : memref<6x8x128xf32, #tpu.memory_space<vmem>>, vector<1x8x128xf32>
      %315 = vector.shape_cast %314 : vector<1x8x128xf32> to vector<8x128xf32>
      %316 = vector.shape_cast %315 : vector<8x128xf32> to vector<1x8x128xf32>
      %cst_146 = arith.constant dense<0.000000e+00> : vector<1xf32>
      %317 = vector.multi_reduction <add>, %316, %cst_146 [1, 2] : vector<1x8x128xf32> to vector<1xf32>
      %318 = vector.shape_cast %317 : vector<1xf32> to vector<1x1x1xf32>
      %319 = vector.extract %318[0, 0, 0] : f32 from vector<1x1x1xf32>
      %cst_147 = arith.constant 0.000000e+00 : f32
      %320 = vector.broadcast %319 : f32 to vector<1x8x128xf32>
      %321 = vector.broadcast %cst_147 : f32 to vector<1x8x128xf32>
      %322 = arith.select %313, %320, %321 : vector<1x8x128xi1>, vector<1x8x128xf32>
      %323 = arith.addf %311, %322 : vector<1x8x128xf32>
      %c3_i32 = arith.constant 3 : i32
      %324 = vector.broadcast %c3_i32 : i32 to vector<1x8x128xi32>
      %325 = arith.cmpi eq, %286, %324 : vector<1x8x128xi32>
      %c3_148 = arith.constant 3 : index
      %c0_149 = arith.constant 0 : index
      %c0_150 = arith.constant 0 : index
      %326 = vector.load %arg5[%c3_148, %c0_149, %c0_150] : memref<6x8x128xf32, #tpu.memory_space<vmem>>, vector<1x8x128xf32>
      %327 = vector.shape_cast %326 : vector<1x8x128xf32> to vector<8x128xf32>
      %328 = vector.shape_cast %327 : vector<8x128xf32> to vector<1x8x128xf32>
      %cst_151 = arith.constant dense<0.000000e+00> : vector<1xf32>
      %329 = vector.multi_reduction <add>, %328, %cst_151 [1, 2] : vector<1x8x128xf32> to vector<1xf32>
      %330 = vector.shape_cast %329 : vector<1xf32> to vector<1x1x1xf32>
      %331 = vector.extract %330[0, 0, 0] : f32 from vector<1x1x1xf32>
      %cst_152 = arith.constant 0.000000e+00 : f32
      %332 = vector.broadcast %331 : f32 to vector<1x8x128xf32>
      %333 = vector.broadcast %cst_152 : f32 to vector<1x8x128xf32>
      %334 = arith.select %325, %332, %333 : vector<1x8x128xi1>, vector<1x8x128xf32>
      %335 = arith.addf %323, %334 : vector<1x8x128xf32>
      %c4_i32 = arith.constant 4 : i32
      %336 = vector.broadcast %c4_i32 : i32 to vector<1x8x128xi32>
      %337 = arith.cmpi eq, %286, %336 : vector<1x8x128xi32>
      %c4_153 = arith.constant 4 : index
      %c0_154 = arith.constant 0 : index
      %c0_155 = arith.constant 0 : index
      %338 = vector.load %arg5[%c4_153, %c0_154, %c0_155] : memref<6x8x128xf32, #tpu.memory_space<vmem>>, vector<1x8x128xf32>
      %339 = vector.shape_cast %338 : vector<1x8x128xf32> to vector<8x128xf32>
      %340 = vector.shape_cast %339 : vector<8x128xf32> to vector<1x8x128xf32>
      %cst_156 = arith.constant dense<0.000000e+00> : vector<1xf32>
      %341 = vector.multi_reduction <add>, %340, %cst_156 [1, 2] : vector<1x8x128xf32> to vector<1xf32>
      %342 = vector.shape_cast %341 : vector<1xf32> to vector<1x1x1xf32>
      %343 = vector.extract %342[0, 0, 0] : f32 from vector<1x1x1xf32>
      %cst_157 = arith.constant 0.000000e+00 : f32
      %344 = vector.broadcast %343 : f32 to vector<1x8x128xf32>
      %345 = vector.broadcast %cst_157 : f32 to vector<1x8x128xf32>
      %346 = arith.select %337, %344, %345 : vector<1x8x128xi1>, vector<1x8x128xf32>
      %347 = arith.addf %335, %346 : vector<1x8x128xf32>
      %c5_i32 = arith.constant 5 : i32
      %348 = vector.broadcast %c5_i32 : i32 to vector<1x8x128xi32>
      %349 = arith.cmpi eq, %286, %348 : vector<1x8x128xi32>
      %c5_158 = arith.constant 5 : index
      %c0_159 = arith.constant 0 : index
      %c0_160 = arith.constant 0 : index
      %350 = vector.load %arg5[%c5_158, %c0_159, %c0_160] : memref<6x8x128xf32, #tpu.memory_space<vmem>>, vector<1x8x128xf32>
      %351 = vector.shape_cast %350 : vector<1x8x128xf32> to vector<8x128xf32>
      %352 = vector.shape_cast %351 : vector<8x128xf32> to vector<1x8x128xf32>
      %cst_161 = arith.constant dense<0.000000e+00> : vector<1xf32>
      %353 = vector.multi_reduction <add>, %352, %cst_161 [1, 2] : vector<1x8x128xf32> to vector<1xf32>
      %354 = vector.shape_cast %353 : vector<1xf32> to vector<1x1x1xf32>
      %355 = vector.extract %354[0, 0, 0] : f32 from vector<1x1x1xf32>
      %cst_162 = arith.constant 0.000000e+00 : f32
      %356 = vector.broadcast %355 : f32 to vector<1x8x128xf32>
      %357 = vector.broadcast %cst_162 : f32 to vector<1x8x128xf32>
      %358 = arith.select %349, %356, %357 : vector<1x8x128xi1>, vector<1x8x128xf32>
      %359 = arith.addf %347, %358 : vector<1x8x128xf32>
      %c0_163 = arith.constant 0 : index
      %c0_164 = arith.constant 0 : index
      %c0_165 = arith.constant 0 : index
      %360 = vector.load %arg4[%c0_163, %c0_164, %c0_165] : memref<1x8x128xf32, #tpu.memory_space<vmem>>, vector<1x8x128xf32>
      tpu.vector_store %arg4[%c0_163, %c0_164, %c0_165], %359 {strides = array<i32>} : memref<1x8x128xf32, #tpu.memory_space<vmem>>, vector<1x8x128xf32>,
    } else {
    }
    return
  }
  func.func @transform_0(%arg0: i32, %arg1: i32) -> (i32, i32, i32) {
    %c1_i32 = arith.constant 1 : i32
    %0 = arith.muli %arg0, %c1_i32 : i32
    %1 = arith.addi %0, %arg1 : i32
    %c0_i32 = arith.constant 0 : i32
    %2 = arith.minsi %1, %c0_i32 : i32
    %c0_i32_0 = arith.constant 0 : i32
    %c0_i32_1 = arith.constant 0 : i32
    %c0_i32_2 = arith.constant 0 : i32
    return %c0_i32_0, %2, %c0_i32_1 : i32, i32, i32
  }
  func.func @transform_1(%arg0: i32, %arg1: i32) -> (i32, i32, i32) {
    %c1_i32 = arith.constant 1 : i32
    %0 = arith.muli %arg0, %c1_i32 : i32
    %1 = arith.addi %0, %arg1 : i32
    %c0_i32 = arith.constant 0 : i32
    %2 = arith.minsi %1, %c0_i32 : i32
    %c0_i32_0 = arith.constant 0 : i32
    %c0_i32_1 = arith.constant 0 : i32
    %c0_i32_2 = arith.constant 0 : i32
    return %c0_i32_0, %2, %c0_i32_1 : i32, i32, i32
  }
  func.func @transform_2(%arg0: i32, %arg1: i32) -> (i32, i32, i32) {
    %c0_i32 = arith.constant 0 : i32
    %c0_i32_0 = arith.constant 0 : i32
    %c0_i32_1 = arith.constant 0 : i32
    return %arg0, %c0_i32, %c0_i32_0 : i32, i32, i32
  }
}

</mosaic_0001>

<llo_original>
// kernel: yolo_loss.1
$region0: #{yolo_loss.1}
  #allocation0 [shape = 'u32[]', space=smem, size = 0x4, offset = 0x4, fixed_abs, tag = 'smem constant byte address 0x4 - core index']
  #allocation1 [shape = 'u32[144,128]{1,0:T(1,128)}', space=vmem, size = 0x12000, scoped, tag = 'internal scratch']
  #allocation2 [shape = 'f32[6,8,128]{2,1,0:T(8,128)}', space=vmem, size = 0x6000, scoped, tag = 'scratch operand']
  %s0 = inlined_call_operand.vmem [shape: f32[9,32,128], index: 0, kind: input, shape index: {}]
  %s1 = inlined_call_operand.vmem [shape: f32[10,32,128], index: 1, kind: input, shape index: {}]
  %s2 = inlined_call_operand.vmem [shape: f32[1,8,128], index: 2, kind: output, shape index: {}]
  %s3 = sld [smem:[#allocation0]]
  $region26: #{yolo_loss.1} parent=0
    _
  %s5 = ssub.s32 1, %s3
  %s6 = scalar_select 0, %s5, %s3
  // Predicated region
  $region2: #{yolo_loss.1} parent=0 // pred_check
    _
  $region3: #{yolo_loss.1} parent=0 // pred_check_branch
    %8 = sbr.rel (0) target = $region5
  $region4: #{yolo_loss.1} parent=0 // pred_region
    %s9 = sadd.s32 0, 0
    %p10 = scmp.lt.s32.totalorder %s9, 0
    %s11 = scalar_select %p10, %s9, 0
    %s12 = smul.u32 4, %s11
    %p13 = scmp.lt.s32.totalorder %s12, 3
    %s14 = scalar_select %p13, %s12, 3
    %s15 = smul.addr %s14, 8
    %s16 = scalar_lea.vmem %s0, %s15
    %s17 = sadd.s32 0, 0
    %p18 = scmp.lt.s32.totalorder %s17, 0
    %s19 = scalar_select %p18, %s17, 0
    %s20 = smul.u32 4, %s19
  $region5: #{yolo_loss.1} parent=0 // pred_fallthru
    _
  // Predicated region
  $region6: #{yolo_loss.1} parent=0 // pred_check
    _
  $region7: #{yolo_loss.1} parent=0 // pred_check_branch
    %22 = sbr.rel (0) target = $region9
  $region8: #{yolo_loss.1} parent=0 // pred_region
    %s23 = sadd.s32 0, 0
    %p24 = scmp.lt.s32.totalorder %s23, 0
    %s25 = scalar_select %p24, %s23, 0
    %s26 = smul.u32 4, %s25
    %p27 = scmp.lt.s32.totalorder %s26, 3
    %s28 = scalar_select %p27, %s26, 3
    %s29 = smul.addr %s28, 8
    %s30 = scalar_lea.vmem %s1, %s29
    %s31 = sadd.s32 0, 0
    %p32 = scmp.lt.s32.totalorder %s31, 0
    %s33 = scalar_select %p32, %s31, 0
    %s34 = smul.u32 4, %s33
  $region9: #{yolo_loss.1} parent=0 // pred_fallthru
    _
  %s35 = sadd.s32 0, 0
  %p36 = scmp.lt.s32.totalorder %s35, 0
  %s37 = scalar_select %p36, %s35, 0
  %s38 = smul.u32 4, %s37
  %p39 = scmp.lt.s32.totalorder %s38, 3
  %s40 = scalar_select %p39, %s38, 3
  %s41 = smul.addr %s40, 8
  %s42 = scalar_lea.vmem %s0, %s41
  %s43 = sadd.s32 0, 0
  %p44 = scmp.lt.s32.totalorder %s43, 0
  %s45 = scalar_select %p44, %s43, 0
  %s46 = smul.u32 4, %s45
  %p47 = scmp.lt.s32.totalorder %s46, 3
  %s48 = scalar_select %p47, %s46, 3
  %s49 = smul.addr %s48, 8
  %s50 = scalar_lea.vmem %s1, %s49
  %s51 = sadd.s32 0, 0
  %p52 = scmp.lt.s32.totalorder %s51, 0
  %s53 = scalar_select %p52, %s51, 0
  %s54 = smul.u32 4, %s53
  %p55 = scmp.lt.s32.totalorder %s54, 3
  %s56 = scalar_select %p55, %s54, 3
  %s57 = smul.addr %s56, 8
  %s58 = scalar_lea.vmem %s0, %s57
  %s59 = sadd.s32 0, 0
  %p60 = scmp.lt.s32.totalorder %s59, 0
  %s61 = scalar_select %p60, %s59, 0
  %s62 = smul.u32 4, %s61
  %s63 = sadd.s32 0, 0
  %p64 = scmp.lt.s32.totalorder %s63, 0
  %s65 = scalar_select %p64, %s63, 0
  %s66 = smul.u32 4, %s65
  %p67 = scmp.lt.s32.totalorder %s66, 3
  %s68 = scalar_select %p67, %s66, 3
  %s69 = smul.addr %s68, 8
  %s70 = scalar_lea.vmem %s1, %s69
  %s71 = sadd.s32 0, 0
  %p72 = scmp.lt.s32.totalorder %s71, 0
  %s73 = scalar_select %p72, %s71, 0
  %s74 = smul.u32 4, %s73
  %p75 = scmp.eq.s32.totalorder 0, 0
  // Predicated region
  $region10: #{yolo_loss.1} parent=0 // pred_check
    %p76 = pneg %p75
  $region11: #{yolo_loss.1} parent=0 // pred_check_branch
    %78 = sbr.rel (%p76) target = $region13
  $region12: #{yolo_loss.1} parent=0 // pred_region
    %79 = vst [vmem:[#allocation2] sm:$0xff] 0.0
    %80 = vst [vmem:[#allocation2 + $0x8] sm:$0xff] 0.0
    %81 = vst [vmem:[#allocation2 + $0x10] sm:$0xff] 0.0
    %82 = vst [vmem:[#allocation2 + $0x18] sm:$0xff] 0.0
    %83 = vst [vmem:[#allocation2 + $0x20] sm:$0xff] 0.0
    %84 = vst [vmem:[#allocation2 + $0x28] sm:$0xff] 0.0
  $region13: #{yolo_loss.1} parent=0 // pred_fallthru
    _
  %v85 = vld [vmem:[%s58] sm:$0xff]
  %v86 = vld [vmem:[%s58 + $0x8] sm:$0xff]
  %v87 = vld [vmem:[%s58 + $0x10] sm:$0xff]
  %v88 = vld [vmem:[%s58 + $0x18] sm:$0xff]
  %s89 = scalar_lea.vmem %s58, 32
  %v90 = vld [vmem:[%s89] sm:$0xff]
  %v91 = vld [vmem:[%s89 + $0x8] sm:$0xff]
  %v92 = vld [vmem:[%s89 + $0x10] sm:$0xff]
  %v93 = vld [vmem:[%s89 + $0x18] sm:$0xff]
  %s94 = scalar_lea.vmem %s58, 64
  %v95 = vld [vmem:[%s94] sm:$0xff]
  %v96 = vld [vmem:[%s94 + $0x8] sm:$0xff]
  %v97 = vld [vmem:[%s94 + $0x10] sm:$0xff]
  %v98 = vld [vmem:[%s94 + $0x18] sm:$0xff]
  %s99 = scalar_lea.vmem %s58, 96
  %v100 = vld [vmem:[%s99] sm:$0xff]
  %v101 = vld [vmem:[%s99 + $0x8] sm:$0xff]
  %v102 = vld [vmem:[%s99 + $0x10] sm:$0xff]
  %v103 = vld [vmem:[%s99 + $0x18] sm:$0xff]
  %s104 = scalar_lea.vmem %s58, 128
  %v105 = vld [vmem:[%s104] sm:$0xff]
  %v106 = vld [vmem:[%s104 + $0x8] sm:$0xff]
  %v107 = vld [vmem:[%s104 + $0x10] sm:$0xff]
  %v108 = vld [vmem:[%s104 + $0x18] sm:$0xff]
  %v109 = vld [vmem:[%s70] sm:$0xff]
  %v110 = vld [vmem:[%s70 + $0x8] sm:$0xff]
  %v111 = vld [vmem:[%s70 + $0x10] sm:$0xff]
  %v112 = vld [vmem:[%s70 + $0x18] sm:$0xff]
  %s113 = scalar_lea.vmem %s70, 32
  %v114 = vld [vmem:[%s113] sm:$0xff]
  %v115 = vld [vmem:[%s113 + $0x8] sm:$0xff]
  %v116 = vld [vmem:[%s113 + $0x10] sm:$0xff]
  %v117 = vld [vmem:[%s113 + $0x18] sm:$0xff]
  %s118 = scalar_lea.vmem %s70, 64
  %v119 = vld [vmem:[%s118] sm:$0xff]
  %v120 = vld [vmem:[%s118 + $0x8] sm:$0xff]
  %v121 = vld [vmem:[%s118 + $0x10] sm:$0xff]
  %v122 = vld [vmem:[%s118 + $0x18] sm:$0xff]
  %s123 = scalar_lea.vmem %s70, 96
  %v124 = vld [vmem:[%s123] sm:$0xff]
  %v125 = vld [vmem:[%s123 + $0x8] sm:$0xff]
  %v126 = vld [vmem:[%s123 + $0x10] sm:$0xff]
  %v127 = vld [vmem:[%s123 + $0x18] sm:$0xff]
  %s128 = scalar_lea.vmem %s70, 128
  %v129 = vld [vmem:[%s128] sm:$0xff]
  %v130 = vld [vmem:[%s128 + $0x8] sm:$0xff]
  %v131 = vld [vmem:[%s128 + $0x10] sm:$0xff]
  %v132 = vld [vmem:[%s128 + $0x18] sm:$0xff]
  %s133 = scalar_lea.vmem %s70, 160
  %v134 = vld [vmem:[%s133] sm:$0xff]
  %v135 = vld [vmem:[%s133 + $0x8] sm:$0xff]
  %v136 = vld [vmem:[%s133 + $0x10] sm:$0xff]
  %v137 = vld [vmem:[%s133 + $0x18] sm:$0xff]
  %s138 = scalar_lea.vmem %s70, 192
  %v139 = vld [vmem:[%s138] sm:$0xff]
  %v140 = vld [vmem:[%s138 + $0x8] sm:$0xff]
  %v141 = vld [vmem:[%s138 + $0x10] sm:$0xff]
  %v142 = vld [vmem:[%s138 + $0x18] sm:$0xff]
  %s143 = scalar_lea.vmem %s70, 224
  %v144 = vld [vmem:[%s143] sm:$0xff]
  %v145 = vld [vmem:[%s143 + $0x8] sm:$0xff]
  %v146 = vld [vmem:[%s143 + $0x10] sm:$0xff]
  %v147 = vld [vmem:[%s143 + $0x18] sm:$0xff]
  %s148 = scalar_lea.vmem %s70, 256
  %v149 = vld [vmem:[%s148] sm:$0xff]
  %v150 = vld [vmem:[%s148 + $0x8] sm:$0xff]
  %v151 = vld [vmem:[%s148 + $0x10] sm:$0xff]
  %v152 = vld [vmem:[%s148 + $0x18] sm:$0xff]
  %s153 = scalar_lea.vmem %s70, 288
  %v154 = vld [vmem:[%s153] sm:$0xff]
  %v155 = vld [vmem:[%s153 + $0x8] sm:$0xff]
  %v156 = vld [vmem:[%s153 + $0x10] sm:$0xff]
  %v157 = vld [vmem:[%s153 + $0x18] sm:$0xff]
  %s158 = sadd.s32 0, 0
  %s159 = smul.u32 %s158, 4096
  %v160 = vlaneseq
  %v161 = vshrl.u32 %v160, 7
  %v162 = vadd.s32 %v161, 8
  %v163 = vadd.s32 %v161, 16
  %v164 = vadd.s32 %v161, 24
  %v165 = vmul.u32 %v161, 128
  %v166 = vmul.u32 %v162, 128
  %v167 = vmul.u32 %v163, 128
  %v168 = vmul.u32 %v164, 128
  %v169 = vlaneseq
  %v170 = vand.u32 %v169, 127
  %v171 = vadd.s32 %v165, %v170
  %v172 = vadd.s32 %v166, %v170
  %v173 = vadd.s32 %v167, %v170
  %v174 = vadd.s32 %v168, %v170
  %v175 = vstv %s159
  %v176 = vadd.s32 %v175, %v171
  %v177 = vadd.s32 %v175, %v172
  %v178 = vadd.s32 %v175, %v173
  %v179 = vadd.s32 %v175, %v174
  %vm180 = vcmp.lt.s32.totalorder %v176, 384
  %vm181 = vcmp.lt.s32.totalorder %v177, 384
  %vm182 = vcmp.lt.s32.totalorder %v178, 384
  %vm183 = vcmp.lt.s32.totalorder %v179, 384
  %vm184 = vcmp.eq.f32.partialorder %v109, 1.0
  %vm185 = vcmp.eq.f32.partialorder %v110, 1.0
  %vm186 = vcmp.eq.f32.partialorder %v111, 1.0
  %vm187 = vcmp.eq.f32.partialorder %v112, 1.0
  %vm188 = vmand %vm180, %vm184
  %vm189 = vmand %vm181, %vm185
  %vm190 = vmand %vm182, %vm186
  %vm191 = vmand %vm183, %vm187
  %vm192 = vcmp.eq.f32.partialorder %v109, 0.0
  %vm193 = vcmp.eq.f32.partialorder %v110, 0.0
  %vm194 = vcmp.eq.f32.partialorder %v111, 0.0
  %vm195 = vcmp.eq.f32.partialorder %v112, 0.0
  %vm196 = vmand %vm180, %vm192
  %vm197 = vmand %vm181, %vm193
  %vm198 = vmand %vm182, %vm194
  %vm199 = vmand %vm183, %vm195
  %v200 = vmax.f32 %v85, 0.0
  %v201 = vmax.f32 %v86, 0.0
  %v202 = vmax.f32 %v87, 0.0
  %v203 = vmax.f32 %v88, 0.0
  %v204 = vand.u32 2147483647, %v85
  %v205 = vand.u32 2147483647, %v86
  %v206 = vand.u32 2147483647, %v87
  %v207 = vand.u32 2147483647, %v88
  %v208 = vsub.f32 0.0, %v204
  %v209 = vsub.f32 0.0, %v205
  %v210 = vsub.f32 0.0, %v206
  %v211 = vsub.f32 0.0, %v207
  %v212 = vmul.f32 %v208, 1.442695
  %v213 = vpow.pop %v212
  %v214 = vmul.f32 %v209, 1.442695
  %v215 = vpow.pop %v214
  %v216 = vmul.f32 %v210, 1.442695
  %v217 = vpow.pop %v216
  %v218 = vmul.f32 %v211, 1.442695
  %v219 = vpow.pop %v218
  %v220 = vadd.f32 %v213, 1.0
  %v221 = vlog2.pop %v220
  %v222 = vmul.f32 %v221, 0.6931472
  %v223 = vmul.f32 -0.5, %v213
  %v224 = vadd.f32 %v223, 1.0
  %v225 = vmul.f32 %v224, %v213
  %v226 = vand.u32 2147483647, %v213
  %vm227 = vcmp.lt.f32.partialorder %v226, 0.0004427343
  %v228 = vsel %vm227, %v225, %v222
  %v229 = vadd.f32 %v215, 1.0
  %v230 = vlog2.pop %v229
  %v231 = vmul.f32 %v230, 0.6931472
  %v232 = vmul.f32 -0.5, %v215
  %v233 = vadd.f32 %v232, 1.0
  %v234 = vmul.f32 %v233, %v215
  %v235 = vand.u32 2147483647, %v215
  %vm236 = vcmp.lt.f32.partialorder %v235, 0.0004427343
  %v237 = vsel %vm236, %v234, %v231
  %v238 = vadd.f32 %v217, 1.0
  %v239 = vlog2.pop %v238
  %v240 = vmul.f32 %v239, 0.6931472
  %v241 = vmul.f32 -0.5, %v217
  %v242 = vadd.f32 %v241, 1.0
  %v243 = vmul.f32 %v242, %v217
  %v244 = vand.u32 2147483647, %v217
  %vm245 = vcmp.lt.f32.partialorder %v244, 0.0004427343
  %v246 = vsel %vm245, %v243, %v240
  %v247 = vadd.f32 %v219, 1.0
  %v248 = vlog2.pop %v247
  %v249 = vmul.f32 %v248, 0.6931472
  %v250 = vmul.f32 -0.5, %v219
  %v251 = vadd.f32 %v250, 1.0
  %v252 = vmul.f32 %v251, %v219
  %v253 = vand.u32 2147483647, %v219
  %vm254 = vcmp.lt.f32.partialorder %v253, 0.0004427343
  %v255 = vsel %vm254, %v252, %v249
  %v256 = vadd.f32 %v200, %v228
  %v257 = vadd.f32 %v201, %v237
  %v258 = vadd.f32 %v202, %v246
  %v259 = vadd.f32 %v203, %v255
  %v260 = vxor.u32 %v90, 2147483648
  %v261 = vxor.u32 %v91, 2147483648
  %v262 = vxor.u32 %v92, 2147483648
  %v263 = vxor.u32 %v93, 2147483648
  %v264 = vmul.f32 %v260, 1.442695
  %v265 = vpow.pop %v264
  %v266 = vmul.f32 %v261, 1.442695
  %v267 = vpow.pop %v266
  %v268 = vmul.f32 %v262, 1.442695
  %v269 = vpow.pop %v268
  %v270 = vmul.f32 %v263, 1.442695
  %v271 = vpow.pop %v270
  %v272 = vadd.f32 %v265, 1.0
  %v273 = vadd.f32 %v267, 1.0
  %v274 = vadd.f32 %v269, 1.0
  %v275 = vadd.f32 %v271, 1.0
  %v276 = vrcp.pop %v272
  %v277 = vmul.f32 1.0, %v276
  %v278 = vrcp.pop %v273
  %v279 = vmul.f32 1.0, %v278
  %v280 = vrcp.pop %v274
  %v281 = vmul.f32 1.0, %v280
  %v282 = vrcp.pop %v275
  %v283 = vmul.f32 1.0, %v282
  %v284 = vxor.u32 %v95, 2147483648
  %v285 = vxor.u32 %v96, 2147483648
  %v286 = vxor.u32 %v97, 2147483648
  %v287 = vxor.u32 %v98, 2147483648
  %v288 = vmul.f32 %v284, 1.442695
  %v289 = vpow.pop %v288
  %v290 = vmul.f32 %v285, 1.442695
  %v291 = vpow.pop %v290
  %v292 = vmul.f32 %v286, 1.442695
  %v293 = vpow.pop %v292
  %v294 = vmul.f32 %v287, 1.442695
  %v295 = vpow.pop %v294
  %v296 = vadd.f32 %v289, 1.0
  %v297 = vadd.f32 %v291, 1.0
  %v298 = vadd.f32 %v293, 1.0
  %v299 = vadd.f32 %v295, 1.0
  %v300 = vrcp.pop %v296
  %v301 = vmul.f32 1.0, %v300
  %v302 = vrcp.pop %v297
  %v303 = vmul.f32 1.0, %v302
  %v304 = vrcp.pop %v298
  %v305 = vmul.f32 1.0, %v304
  %v306 = vrcp.pop %v299
  %v307 = vmul.f32 1.0, %v306
  %v308 = vmul.f32 %v100, %v139
  %v309 = vmul.f32 %v101, %v140
  %v310 = vmul.f32 %v102, %v141
  %v311 = vmul.f32 %v103, %v142
  %v312 = vmul.f32 %v308, 1.442695
  %v313 = vpow.pop %v312
  %v314 = vmul.f32 %v309, 1.442695
  %v315 = vpow.pop %v314
  %v316 = vmul.f32 %v310, 1.442695
  %v317 = vpow.pop %v316
  %v318 = vmul.f32 %v311, 1.442695
  %v319 = vpow.pop %v318
  %v320 = vmul.f32 %v105, %v144
  %v321 = vmul.f32 %v106, %v145
  %v322 = vmul.f32 %v107, %v146
  %v323 = vmul.f32 %v108, %v147
  %v324 = vmul.f32 %v320, 1.442695
  %v325 = vpow.pop %v324
  %v326 = vmul.f32 %v321, 1.442695
  %v327 = vpow.pop %v326
  %v328 = vmul.f32 %v322, 1.442695
  %v329 = vpow.pop %v328
  %v330 = vmul.f32 %v323, 1.442695
  %v331 = vpow.pop %v330
  %v332 = vmul.f32 %v313, 0.5
  %v333 = vmul.f32 %v315, 0.5
  %v334 = vmul.f32 %v317, 0.5
  %v335 = vmul.f32 %v319, 0.5
  %v336 = vsub.f32 %v277, %v332
  %v337 = vsub.f32 %v279, %v333
  %v338 = vsub.f32 %v281, %v334
  %v339 = vsub.f32 %v283, %v335
  %v340 = vadd.f32 %v277, %v332
  %v341 = vadd.f32 %v279, %v333
  %v342 = vadd.f32 %v281, %v334
  %v343 = vadd.f32 %v283, %v335
  %v344 = vmul.f32 %v325, 0.5
  %v345 = vmul.f32 %v327, 0.5
  %v346 = vmul.f32 %v329, 0.5
  %v347 = vmul.f32 %v331, 0.5
  %v348 = vsub.f32 %v301, %v344
  %v349 = vsub.f32 %v303, %v345
  %v350 = vsub.f32 %v305, %v346
  %v351 = vsub.f32 %v307, %v347
  %v352 = vadd.f32 %v301, %v344
  %v353 = vadd.f32 %v303, %v345
  %v354 = vadd.f32 %v305, %v346
  %v355 = vadd.f32 %v307, %v347
  %v356 = vmul.f32 %v124, 0.5
  %v357 = vmul.f32 %v125, 0.5
  %v358 = vmul.f32 %v126, 0.5
  %v359 = vmul.f32 %v127, 0.5
  %v360 = vsub.f32 %v114, %v356
  %v361 = vsub.f32 %v115, %v357
  %v362 = vsub.f32 %v116, %v358
  %v363 = vsub.f32 %v117, %v359
  %v364 = vadd.f32 %v114, %v356
  %v365 = vadd.f32 %v115, %v357
  %v366 = vadd.f32 %v116, %v358
  %v367 = vadd.f32 %v117, %v359
  %v368 = vmul.f32 %v129, 0.5
  %v369 = vmul.f32 %v130, 0.5
  %v370 = vmul.f32 %v131, 0.5
  %v371 = vmul.f32 %v132, 0.5
  %v372 = vsub.f32 %v119, %v368
  %v373 = vsub.f32 %v120, %v369
  %v374 = vsub.f32 %v121, %v370
  %v375 = vsub.f32 %v122, %v371
  %v376 = vadd.f32 %v119, %v368
  %v377 = vadd.f32 %v120, %v369
  %v378 = vadd.f32 %v121, %v370
  %v379 = vadd.f32 %v122, %v371
  %v380 = vmin.f32 %v340, %v364
  %v381 = vmin.f32 %v341, %v365
  %v382 = vmin.f32 %v342, %v366
  %v383 = vmin.f32 %v343, %v367
  %v384 = vmax.f32 %v336, %v360
  %v385 = vmax.f32 %v337, %v361
  %v386 = vmax.f32 %v338, %v362
  %v387 = vmax.f32 %v339, %v363
  %v388 = vsub.f32 %v380, %v384
  %v389 = vsub.f32 %v381, %v385
  %v390 = vsub.f32 %v382, %v386
  %v391 = vsub.f32 %v383, %v387
  %v392 = vmax.f32 %v388, 0.0
  %v393 = vmax.f32 %v389, 0.0
  %v394 = vmax.f32 %v390, 0.0
  %v395 = vmax.f32 %v391, 0.0
  %v396 = vmin.f32 %v352, %v376
  %v397 = vmin.f32 %v353, %v377
  %v398 = vmin.f32 %v354, %v378
  %v399 = vmin.f32 %v355, %v379
  %v400 = vmax.f32 %v348, %v372
  %v401 = vmax.f32 %v349, %v373
  %v402 = vmax.f32 %v350, %v374
  %v403 = vmax.f32 %v351, %v375
  %v404 = vsub.f32 %v396, %v400
  %v405 = vsub.f32 %v397, %v401
  %v406 = vsub.f32 %v398, %v402
  %v407 = vsub.f32 %v399, %v403
  %v408 = vmax.f32 %v404, 0.0
  %v409 = vmax.f32 %v405, 0.0
  %v410 = vmax.f32 %v406, 0.0
  %v411 = vmax.f32 %v407, 0.0
  %v412 = vmul.f32 %v392, %v408
  %v413 = vmul.f32 %v393, %v409
  %v414 = vmul.f32 %v394, %v410
  %v415 = vmul.f32 %v395, %v411
  %v416 = vsub.f32 %v340, %v336
  %v417 = vsub.f32 %v341, %v337
  %v418 = vsub.f32 %v342, %v338
  %v419 = vsub.f32 %v343, %v339
  %v420 = vsub.f32 %v352, %v348
  %v421 = vsub.f32 %v353, %v349
  %v422 = vsub.f32 %v354, %v350
  %v423 = vsub.f32 %v355, %v351
  %v424 = vmul.f32 %v416, %v420
  %v425 = vmul.f32 %v417, %v421
  %v426 = vmul.f32 %v418, %v422
  %v427 = vmul.f32 %v419, %v423
  %v428 = vand.u32 2147483647, %v424
  %v429 = vand.u32 2147483647, %v425
  %v430 = vand.u32 2147483647, %v426
  %v431 = vand.u32 2147483647, %v427
  %v432 = vsub.f32 %v364, %v360
  %v433 = vsub.f32 %v365, %v361
  %v434 = vsub.f32 %v366, %v362
  %v435 = vsub.f32 %v367, %v363
  %v436 = vsub.f32 %v376, %v372
  %v437 = vsub.f32 %v377, %v373
  %v438 = vsub.f32 %v378, %v374
  %v439 = vsub.f32 %v379, %v375
  %v440 = vmul.f32 %v432, %v436
  %v441 = vmul.f32 %v433, %v437
  %v442 = vmul.f32 %v434, %v438
  %v443 = vmul.f32 %v435, %v439
  %v444 = vand.u32 2147483647, %v440
  %v445 = vand.u32 2147483647, %v441
  %v446 = vand.u32 2147483647, %v442
  %v447 = vand.u32 2147483647, %v443
  %v448 = vadd.f32 %v428, %v444
  %v449 = vadd.f32 %v429, %v445
  %v450 = vadd.f32 %v430, %v446
  %v451 = vadd.f32 %v431, %v447
  %v452 = vsub.f32 %v448, %v412
  %v453 = vsub.f32 %v449, %v413
  %v454 = vsub.f32 %v450, %v414
  %v455 = vsub.f32 %v451, %v415
  %v456 = vadd.f32 %v452, 1e-06
  %v457 = vadd.f32 %v453, 1e-06
  %v458 = vadd.f32 %v454, 1e-06
  %v459 = vadd.f32 %v455, 1e-06
  %v460 = vrcp.pop %v456
  %v461 = vrcp.pop %v457
  %v462 = vrcp.pop %v458
  %v463 = vrcp.pop %v459
  %v464 = vmul.f32 %v412, %v460
  %v465 = vmul.f32 %v413, %v461
  %v466 = vmul.f32 %v414, %v462
  %v467 = vmul.f32 %v415, %v463
  %v468 = vsel %vm196, %v256, 0.0
  %v469 = vsel %vm197, %v257, 0.0
  %v470 = vsel %vm198, %v258, 0.0
  %v471 = vsel %vm199, %v259, 0.0
  %v472 = vmul.f32 %v85, %v464
  %v473 = vmul.f32 %v86, %v465
  %v474 = vmul.f32 %v87, %v466
  %v475 = vmul.f32 %v88, %v467
  %v476 = vsub.f32 %v256, %v472
  %v477 = vsub.f32 %v257, %v473
  %v478 = vsub.f32 %v258, %v474
  %v479 = vsub.f32 %v259, %v475
  %v480 = vsel %vm188, %v476, 0.0
  %v481 = vsel %vm189, %v477, 0.0
  %v482 = vsel %vm190, %v478, 0.0
  %v483 = vsel %vm191, %v479, 0.0
  %v484 = vmul.f32 %v124, %v149
  %v485 = vmul.f32 %v125, %v150
  %v486 = vmul.f32 %v126, %v151
  %v487 = vmul.f32 %v127, %v152
  %v488 = vadd.f32 %v484, 1e-16
  %v489 = vadd.f32 %v485, 1e-16
  %v490 = vadd.f32 %v486, 1e-16
  %v491 = vadd.f32 %v487, 1e-16
  %v492 = vlog2.pop %v488
  %v493 = vmul.f32 %v492, 0.6931472
  %v494 = vlog2.pop %v489
  %v495 = vmul.f32 %v494, 0.6931472
  %v496 = vlog2.pop %v490
  %v497 = vmul.f32 %v496, 0.6931472
  %v498 = vlog2.pop %v491
  %v499 = vmul.f32 %v498, 0.6931472
  %v500 = vmul.f32 %v129, %v154
  %v501 = vmul.f32 %v130, %v155
  %v502 = vmul.f32 %v131, %v156
  %v503 = vmul.f32 %v132, %v157
  %v504 = vadd.f32 %v500, 1e-16
  %v505 = vadd.f32 %v501, 1e-16
  %v506 = vadd.f32 %v502, 1e-16
  %v507 = vadd.f32 %v503, 1e-16
  %v508 = vlog2.pop %v504
  %v509 = vmul.f32 %v508, 0.6931472
  %v510 = vlog2.pop %v505
  %v511 = vmul.f32 %v510, 0.6931472
  %v512 = vlog2.pop %v506
  %v513 = vmul.f32 %v512, 0.6931472
  %v514 = vlog2.pop %v507
  %v515 = vmul.f32 %v514, 0.6931472
  %v516 = vsub.f32 %v277, %v114
  %v517 = vsub.f32 %v279, %v115
  %v518 = vsub.f32 %v281, %v116
  %v519 = vsub.f32 %v283, %v117
  %v520 = vmul.f32 %v516, %v516
  %v521 = vmul.f32 %v517, %v517
  %v522 = vmul.f32 %v518, %v518
  %v523 = vmul.f32 %v519, %v519
  %v524 = vsub.f32 %v301, %v119
  %v525 = vsub.f32 %v303, %v120
  %v526 = vsub.f32 %v305, %v121
  %v527 = vsub.f32 %v307, %v122
  %v528 = vmul.f32 %v524, %v524
  %v529 = vmul.f32 %v525, %v525
  %v530 = vmul.f32 %v526, %v526
  %v531 = vmul.f32 %v527, %v527
  %v532 = vadd.f32 %v520, %v528
  %v533 = vadd.f32 %v521, %v529
  %v534 = vadd.f32 %v522, %v530
  %v535 = vadd.f32 %v523, %v531
  %v536 = vsub.f32 %v100, %v493
  %v537 = vsub.f32 %v101, %v495
  %v538 = vsub.f32 %v102, %v497
  %v539 = vsub.f32 %v103, %v499
  %v540 = vmul.f32 %v536, %v536
  %v541 = vmul.f32 %v537, %v537
  %v542 = vmul.f32 %v538, %v538
  %v543 = vmul.f32 %v539, %v539
  %v544 = vadd.f32 %v532, %v540
  %v545 = vadd.f32 %v533, %v541
  %v546 = vadd.f32 %v534, %v542
  %v547 = vadd.f32 %v535, %v543
  %v548 = vsub.f32 %v105, %v509
  %v549 = vsub.f32 %v106, %v511
  %v550 = vsub.f32 %v107, %v513
  %v551 = vsub.f32 %v108, %v515
  %v552 = vmul.f32 %v548, %v548
  %v553 = vmul.f32 %v549, %v549
  %v554 = vmul.f32 %v550, %v550
  %v555 = vmul.f32 %v551, %v551
  %v556 = vadd.f32 %v544, %v552
  %v557 = vadd.f32 %v545, %v553
  %v558 = vadd.f32 %v546, %v554
  %v559 = vadd.f32 %v547, %v555
  %v560 = vsel %vm188, %v556, 0.0
  %v561 = vsel %vm189, %v557, 0.0
  %v562 = vsel %vm190, %v558, 0.0
  %v563 = vsel %vm191, %v559, 0.0
  %s564 = scalar_lea.vmem %s58, 160
  %v565 = vld [vmem:[%s564] sm:$0xff]
  %v566 = vld [vmem:[%s564 + $0x8] sm:$0xff]
  %v567 = vld [vmem:[%s564 + $0x10] sm:$0xff]
  %v568 = vld [vmem:[%s564 + $0x18] sm:$0xff]
  %s569 = scalar_lea.vmem %s58, 192
  %v570 = vld [vmem:[%s569] sm:$0xff]
  %v571 = vld [vmem:[%s569 + $0x8] sm:$0xff]
  %v572 = vld [vmem:[%s569 + $0x10] sm:$0xff]
  %v573 = vld [vmem:[%s569 + $0x18] sm:$0xff]
  %v574 = vmax.f32 %v565, %v570
  %v575 = vmax.f32 %v566, %v571
  %v576 = vmax.f32 %v567, %v572
  %v577 = vmax.f32 %v568, %v573
  %s578 = scalar_lea.vmem %s58, 224
  %v579 = vld [vmem:[%s578] sm:$0xff]
  %v580 = vld [vmem:[%s578 + $0x8] sm:$0xff]
  %v581 = vld [vmem:[%s578 + $0x10] sm:$0xff]
  %v582 = vld [vmem:[%s578 + $0x18] sm:$0xff]
  %v583 = vmax.f32 %v574, %v579
  %v584 = vmax.f32 %v575, %v580
  %v585 = vmax.f32 %v576, %v581
  %v586 = vmax.f32 %v577, %v582
  %s587 = scalar_lea.vmem %s58, 256
  %v588 = vld [vmem:[%s587] sm:$0xff]
  %v589 = vld [vmem:[%s587 + $0x8] sm:$0xff]
  %v590 = vld [vmem:[%s587 + $0x10] sm:$0xff]
  %v591 = vld [vmem:[%s587 + $0x18] sm:$0xff]
  %v592 = vmax.f32 %v583, %v588
  %v593 = vmax.f32 %v584, %v589
  %v594 = vmax.f32 %v585, %v590
  %v595 = vmax.f32 %v586, %v591
  %v596 = vsub.f32 %v565, %v592
  %v597 = vsub.f32 %v566, %v593
  %v598 = vsub.f32 %v567, %v594
  %v599 = vsub.f32 %v568, %v595
  %v600 = vmul.f32 %v596, 1.442695
  %v601 = vpow.pop %v600
  %v602 = vmul.f32 %v597, 1.442695
  %v603 = vpow.pop %v602
  %v604 = vmul.f32 %v598, 1.442695
  %v605 = vpow.pop %v604
  %v606 = vmul.f32 %v599, 1.442695
  %v607 = vpow.pop %v606
  %v608 = vadd.f32 %v601, 0.0
  %v609 = vadd.f32 %v603, 0.0
  %v610 = vadd.f32 %v605, 0.0
  %v611 = vadd.f32 %v607, 0.0
  %vm612 = vcmp.eq.f32.partialorder %v134, 0.0
  %vm613 = vcmp.eq.f32.partialorder %v135, 0.0
  %vm614 = vcmp.eq.f32.partialorder %v136, 0.0
  %vm615 = vcmp.eq.f32.partialorder %v137, 0.0
  %v616 = vsel %vm612, %v565, 0.0
  %v617 = vsel %vm613, %v566, 0.0
  %v618 = vsel %vm614, %v567, 0.0
  %v619 = vsel %vm615, %v568, 0.0
  %v620 = vsub.f32 %v570, %v592
  %v621 = vsub.f32 %v571, %v593
  %v622 = vsub.f32 %v572, %v594
  %v623 = vsub.f32 %v573, %v595
  %v624 = vmul.f32 %v620, 1.442695
  %v625 = vpow.pop %v624
  %v626 = vmul.f32 %v621, 1.442695
  %v627 = vpow.pop %v626
  %v628 = vmul.f32 %v622, 1.442695
  %v629 = vpow.pop %v628
  %v630 = vmul.f32 %v623, 1.442695
  %v631 = vpow.pop %v630
  %v632 = vadd.f32 %v608, %v625
  %v633 = vadd.f32 %v609, %v627
  %v634 = vadd.f32 %v610, %v629
  %v635 = vadd.f32 %v611, %v631
  %vm636 = vcmp.eq.f32.partialorder %v134, 1.0
  %vm637 = vcmp.eq.f32.partialorder %v135, 1.0
  %vm638 = vcmp.eq.f32.partialorder %v136, 1.0
  %vm639 = vcmp.eq.f32.partialorder %v137, 1.0
  %v640 = vsel %vm636, %v570, %v616
  %v641 = vsel %vm637, %v571, %v617
  %v642 = vsel %vm638, %v572, %v618
  %v643 = vsel %vm639, %v573, %v619
  %v644 = vsub.f32 %v579, %v592
  %v645 = vsub.f32 %v580, %v593
  %v646 = vsub.f32 %v581, %v594
  %v647 = vsub.f32 %v582, %v595
  %v648 = vmul.f32 %v644, 1.442695
  %v649 = vpow.pop %v648
  %v650 = vmul.f32 %v645, 1.442695
  %v651 = vpow.pop %v650
  %v652 = vmul.f32 %v646, 1.442695
  %v653 = vpow.pop %v652
  %v654 = vmul.f32 %v647, 1.442695
  %v655 = vpow.pop %v654
  %v656 = vadd.f32 %v632, %v649
  %v657 = vadd.f32 %v633, %v651
  %v658 = vadd.f32 %v634, %v653
  %v659 = vadd.f32 %v635, %v655
  %vm660 = vcmp.eq.f32.partialorder %v134, 2.0
  %vm661 = vcmp.eq.f32.partialorder %v135, 2.0
  %vm662 = vcmp.eq.f32.partialorder %v136, 2.0
  %vm663 = vcmp.eq.f32.partialorder %v137, 2.0
  %v664 = vsel %vm660, %v579, %v640
  %v665 = vsel %vm661, %v580, %v641
  %v666 = vsel %vm662, %v581, %v642
  %v667 = vsel %vm663, %v582, %v643
  %v668 = vsub.f32 %v588, %v592
  %v669 = vsub.f32 %v589, %v593
  %v670 = vsub.f32 %v590, %v594
  %v671 = vsub.f32 %v591, %v595
  %v672 = vmul.f32 %v668, 1.442695
  %v673 = vpow.pop %v672
  %v674 = vmul.f32 %v669, 1.442695
  %v675 = vpow.pop %v674
  %v676 = vmul.f32 %v670, 1.442695
  %v677 = vpow.pop %v676
  %v678 = vmul.f32 %v671, 1.442695
  %v679 = vpow.pop %v678
  %v680 = vadd.f32 %v656, %v673
  %v681 = vadd.f32 %v657, %v675
  %v682 = vadd.f32 %v658, %v677
  %v683 = vadd.f32 %v659, %v679
  %vm684 = vcmp.eq.f32.partialorder %v134, 3.0
  %vm685 = vcmp.eq.f32.partialorder %v135, 3.0
  %vm686 = vcmp.eq.f32.partialorder %v136, 3.0
  %vm687 = vcmp.eq.f32.partialorder %v137, 3.0
  %v688 = vsel %vm684, %v588, %v664
  %v689 = vsel %vm685, %v589, %v665
  %v690 = vsel %vm686, %v590, %v666
  %v691 = vsel %vm687, %v591, %v667
  %v692 = vlog2.pop %v680
  %v693 = vmul.f32 %v692, 0.6931472
  %v694 = vlog2.pop %v681
  %v695 = vmul.f32 %v694, 0.6931472
  %v696 = vlog2.pop %v682
  %v697 = vmul.f32 %v696, 0.6931472
  %v698 = vlog2.pop %v683
  %v699 = vmul.f32 %v698, 0.6931472
  %v700 = vadd.f32 %v592, %v693
  %v701 = vadd.f32 %v593, %v695
  %v702 = vadd.f32 %v594, %v697
  %v703 = vadd.f32 %v595, %v699
  %v704 = vsub.f32 %v700, %v688
  %v705 = vsub.f32 %v701, %v689
  %v706 = vsub.f32 %v702, %v690
  %v707 = vsub.f32 %v703, %v691
  %v708 = vsel %vm188, %v704, 0.0
  %v709 = vsel %vm189, %v705, 0.0
  %v710 = vsel %vm190, %v706, 0.0
  %v711 = vsel %vm191, %v707, 0.0
  %v712 = vsel %vm188, 1.0, 0.0
  %v713 = vsel %vm189, 1.0, 0.0
  %v714 = vsel %vm190, 1.0, 0.0
  %v715 = vsel %vm191, 1.0, 0.0
  %v716 = vsel %vm196, 1.0, 0.0
  %v717 = vsel %vm197, 1.0, 0.0
  %v718 = vsel %vm198, 1.0, 0.0
  %v719 = vsel %vm199, 1.0, 0.0
  %v720 = vld [vmem:[#allocation2] sm:$0xff]
  %v721 = vadd.f32 %v480, %v481
  %v722 = vadd.f32 %v721, %v482
  %v723 = vadd.f32 %v722, %v483
  %v724 = vadd.f32 %v720, %v723
  %725 = vst [vmem:[#allocation2] sm:$0xff] %v724
  %s726 = scalar_lea.vmem [#allocation2], 8
  %v727 = vld [vmem:[%s726] sm:$0xff]
  %v728 = vadd.f32 %v468, %v469
  %v729 = vadd.f32 %v728, %v470
  %v730 = vadd.f32 %v729, %v471
  %v731 = vadd.f32 %v727, %v730
  %732 = vst [vmem:[%s726] sm:$0xff] %v731
  %s733 = scalar_lea.vmem [#allocation2], 16
  %v734 = vld [vmem:[%s733] sm:$0xff]
  %v735 = vadd.f32 %v560, %v561
  %v736 = vadd.f32 %v735, %v562
  %v737 = vadd.f32 %v736, %v563
  %v738 = vadd.f32 %v734, %v737
  %739 = vst [vmem:[%s733] sm:$0xff] %v738
  %s740 = scalar_lea.vmem [#allocation2], 24
  %v741 = vld [vmem:[%s740] sm:$0xff]
  %v742 = vadd.f32 %v708, %v709
  %v743 = vadd.f32 %v742, %v710
  %v744 = vadd.f32 %v743, %v711
  %v745 = vadd.f32 %v741, %v744
  %746 = vst [vmem:[%s740] sm:$0xff] %v745
  %s747 = scalar_lea.vmem [#allocation2], 32
  %v748 = vld [vmem:[%s747] sm:$0xff]
  %v749 = vadd.f32 %v712, %v713
  %v750 = vadd.f32 %v749, %v714
  %v751 = vadd.f32 %v750, %v715
  %v752 = vadd.f32 %v748, %v751
  %753 = vst [vmem:[%s747] sm:$0xff] %v752
  %s754 = scalar_lea.vmem [#allocation2], 40
  %v755 = vld [vmem:[%s754] sm:$0xff]
  %v756 = vadd.f32 %v716, %v717
  %v757 = vadd.f32 %v756, %v718
  %v758 = vadd.f32 %v757, %v719
  %v759 = vadd.f32 %v755, %v758
  %760 = vst [vmem:[%s754] sm:$0xff] %v759
  // Predicated region
  $region14: #{yolo_loss.1} parent=0 // pred_check
    %p761 = pneg %p75
  $region15: #{yolo_loss.1} parent=0 // pred_check_branch
    %763 = sbr.rel (%p761) target = $region17
  $region16: #{yolo_loss.1} parent=0 // pred_region
    %vm764 = vcmp.eq.s32.totalorder %v170, 0
    %v765 = vld [vmem:[#allocation2] sm:$0xff]
    %766 = vadd.xlane.f32.xlu0 %v765
    %v767 = vpop.xlane.xlu0 %766
    %v768 = vrot.slane %v767, 4
    %v769 = vadd.f32 %v767, %v768
    %v770 = vrot.slane %v769, 2
    %v771 = vadd.f32 %v769, %v770
    %v772 = vrot.slane %v771, 1
    %v773 = vadd.f32 %v771, %v772
    %s774 = vtos %v773
    %v775 = vstv %s774
    %v776 = vsel %vm764, %v775, 0.0
    %v777 = vadd.f32 %v776, 0.0
    %vm778 = vcmp.eq.s32.totalorder %v170, 1
    %v779 = vld [vmem:[%s726] sm:$0xff]
    %780 = vadd.xlane.f32.xlu0 %v779
    %v781 = vpop.xlane.xlu0 %780
    %v782 = vrot.slane %v781, 4
    %v783 = vadd.f32 %v781, %v782
    %v784 = vrot.slane %v783, 2
    %v785 = vadd.f32 %v783, %v784
    %v786 = vrot.slane %v785, 1
    %v787 = vadd.f32 %v785, %v786
    %s788 = vtos %v787
    %v789 = vstv %s788
    %v790 = vsel %vm778, %v789, 0.0
    %v791 = vadd.f32 %v777, %v790
    %vm792 = vcmp.eq.s32.totalorder %v170, 2
    %v793 = vld [vmem:[%s733] sm:$0xff]
    %794 = vadd.xlane.f32.xlu0 %v793
    %v795 = vpop.xlane.xlu0 %794
    %v796 = vrot.slane %v795, 4
    %v797 = vadd.f32 %v795, %v796
    %v798 = vrot.slane %v797, 2
    %v799 = vadd.f32 %v797, %v798
    %v800 = vrot.slane %v799, 1
    %v801 = vadd.f32 %v799, %v800
    %s802 = vtos %v801
    %v803 = vstv %s802
    %v804 = vsel %vm792, %v803, 0.0
    %v805 = vadd.f32 %v791, %v804
    %vm806 = vcmp.eq.s32.totalorder %v170, 3
    %v807 = vld [vmem:[%s740] sm:$0xff]
    %808 = vadd.xlane.f32.xlu0 %v807
    %v809 = vpop.xlane.xlu0 %808
    %v810 = vrot.slane %v809, 4
    %v811 = vadd.f32 %v809, %v810
    %v812 = vrot.slane %v811, 2
    %v813 = vadd.f32 %v811, %v812
    %v814 = vrot.slane %v813, 1
    %v815 = vadd.f32 %v813, %v814
    %s816 = vtos %v815
    %v817 = vstv %s816
    %v818 = vsel %vm806, %v817, 0.0
    %v819 = vadd.f32 %v805, %v818
    %vm820 = vcmp.eq.s32.totalorder %v170, 4
    %v821 = vld [vmem:[%s747] sm:$0xff]
    %822 = vadd.xlane.f32.xlu0 %v821
    %v823 = vpop.xlane.xlu0 %822
    %v824 = vrot.slane %v823, 4
    %v825 = vadd.f32 %v823, %v824
    %v826 = vrot.slane %v825, 2
    %v827 = vadd.f32 %v825, %v826
    %v828 = vrot.slane %v827, 1
    %v829 = vadd.f32 %v827, %v828
    %s830 = vtos %v829
    %v831 = vstv %s830
    %v832 = vsel %vm820, %v831, 0.0
    %v833 = vadd.f32 %v819, %v832
    %vm834 = vcmp.eq.s32.totalorder %v170, 5
    %v835 = vld [vmem:[%s754] sm:$0xff]
    %836 = vadd.xlane.f32.xlu0 %v835
    %v837 = vpop.xlane.xlu0 %836
    %v838 = vrot.slane %v837, 4
    %v839 = vadd.f32 %v837, %v838
    %v840 = vrot.slane %v839, 2
    %v841 = vadd.f32 %v839, %v840
    %v842 = vrot.slane %v841, 1
    %v843 = vadd.f32 %v841, %v842
    %s844 = vtos %v843
    %v845 = vstv %s844
    %v846 = vsel %vm834, %v845, 0.0
    %v847 = vadd.f32 %v833, %v846
    %848 = vst [vmem:[%s2] sm:$0xff] %v847
  $region17: #{yolo_loss.1} parent=0 // pred_fallthru
    _
  // Predicated region
  $region18: #{yolo_loss.1} parent=0 // pred_check
    _
  $region19: #{yolo_loss.1} parent=0 // pred_check_branch
    %850 = sbr.rel (0) target = $region21
  $region20: #{yolo_loss.1} parent=0 // pred_region
    _
  $region21: #{yolo_loss.1} parent=0 // pred_fallthru
    _
  // Predicated region
  $region22: #{yolo_loss.1} parent=0 // pred_check
    _
  $region23: #{yolo_loss.1} parent=0 // pred_check_branch
    %852 = sbr.rel (0) target = $region25
  $region24: #{yolo_loss.1} parent=0 // pred_region
    _
  $region25: #{yolo_loss.1} parent=0 // pred_fallthru
    _

</llo_original>
